<compile_context>
chip_gen: v7x
topology: tpu7x:2x2x1
jax: 0.10.0
libtpu: 0.0.40
codegen_flags: <defaults>
</compile_context>

<pallas_src>
from functools import lru_cache

import jax
import jax.numpy as jnp
from jax.experimental import pallas as pl
from jax.experimental.pallas import tpu as pltpu

TILE_S_MAX = 8192                   # max lane-dim tile (multiple of 128)
_STREAM_BUDGET = 12 * 1024 * 1024   # bytes for double-buffered streamed blocks
_VMEM_LIMIT = 32 * 1024 * 1024      # explicit scoped-VMEM limit, safe v5e..v7x


def _cpad(c):
    return ((c + 7) // 8) * 8


def _leaky_relu(x, slope=0.1):
    return jnp.where(x >= 0, x, slope * x)


def _pw(w, b, x):
    """1x1 conv on a (C_in, TS) block: out[o,:] = sum_i w[o,i]*x[i,:] + b[o]."""
    c_in = x.shape[0]
    if c_in % 8 == 0 or c_in > 16:
        # Well-shaped for the MXU.
        return jnp.dot(w, x, preferred_element_type=jnp.float32) + b
    # Small / unaligned C: unrolled VPU broadcast-MACs; avoids a nearly-empty
    # sublane-padded MXU op and keeps HBM traffic at the true C (no padding).
    acc = w[:, 0:1] * x[0:1, :]
    for i in range(1, c_in):
        acc = acc + w[:, i:i + 1] * x[i:i + 1, :]
    return acc + b


def _pick_tile(s, n, n_streams, c):
    """Lane-dim tile: 128-multiple (or full S), sized from a VMEM budget."""
    per_lane = 2 * n_streams * _cpad(c) * 4          # double-buffered f32 streams
    ts = _STREAM_BUDGET // per_lane
    ts = max(128, min(TILE_S_MAX, (ts // 128) * 128))
    if s <= ts:
        ts = s
        # v7x has 2 TensorCores: when the batch axis has a single step, split the
        # spatial axis into >= 2 parallel blocks so both cores get work.
        if n == 1 and s > 256:
            ts = ((s + 255) // 256) * 128            # ~ceil(s/2) rounded to 128
    return ts


# ----------------------------- block specs ---------------------------------- #

def _row_spec(c, ts):
    # (N, C, S) array -> kernel block (C, ts): batch squeezed, channels full,
    # spatial (lane) axis tiled.
    return pl.BlockSpec((None, c, ts), lambda n, s: (n, 0, s))


def _w_spec(c):
    return pl.BlockSpec((c, c), lambda n, s: (0, 0))


def _b_spec(c):
    return pl.BlockSpec((c, 1), lambda n, s: (0, 0))


def _wstack_spec(c):
    return pl.BlockSpec((4, c, c), lambda n, s: (0, 0, 0))


def _bstack_spec(c):
    return pl.BlockSpec((4, c, 1), lambda n, s: (0, 0, 0))


def _cparams():
    return pltpu.CompilerParams(
        dimension_semantics=("parallel", "parallel"),
        vmem_limit_bytes=_VMEM_LIMIT,
    )


# ------------------------------- kernels ------------------------------------ #

def _pw_conv_kernel(x_ref, w_ref, b_ref, o_ref):
    o_ref[...] = _pw(w_ref[...], b_ref[...], x_ref[...])


def _pw_conv_res_kernel(x_ref, res_ref, w_ref, b_ref, o_ref):
    # final 1x1 conv fused with the residual add: cat(x_out) + x
    o_ref[...] = _pw(w_ref[...], b_ref[...], x_ref[...]) + res_ref[...]


def _freq_kernel_fused(re_ref, im_ref, w_ref, b_ref, re_o_ref, im_o_ref):
    # mag / phase computed in-kernel (2 input streams only).
    re = re_ref[...]
    im = im_ref[...]
    mag = jnp.sqrt(re * re + im * im)       # torch.abs(x_freq)
    pha = jnp.arctan2(im, re)               # torch.angle(x_freq)
    m = _pw(w_ref[0], b_ref[0], mag)        # process1
    m = _leaky_relu(m)
    m = _pw(w_ref[1], b_ref[1], m)
    p = _pw(w_ref[2], b_ref[2], pha)        # process2
    p = _leaky_relu(p)
    p = _pw(w_ref[3], b_ref[3], p)
    re_o_ref[...] = m * jnp.cos(p)          # polar -> cartesian
    im_o_ref[...] = m * jnp.sin(p)


def _freq_kernel_mp(mag_ref, pha_ref, w_ref, b_ref, m_o_ref, p_o_ref):
    # Fallback: mag/pha computed outside; kernel is matmul/lrelu only.
    m = _pw(w_ref[0], b_ref[0], mag_ref[...])
    m = _leaky_relu(m)
    m_o_ref[...] = _pw(w_ref[1], b_ref[1], m)
    p = _pw(w_ref[2], b_ref[2], pha_ref[...])
    p = _leaky_relu(p)
    p_o_ref[...] = _pw(w_ref[3], b_ref[3], p)


# ---------------- capability probe (atan2/sin/cos in Mosaic) ----------------- #

def _trans_probe_kernel(a_ref, b_ref, o_ref):
    a = a_ref[...]
    b = b_ref[...]
    o_ref[...] = jnp.arctan2(a, b) + jnp.sin(a) + jnp.cos(b) + jnp.sqrt(a * a + b * b)


@lru_cache(maxsize=None)
def _freq_fused_supported():
    """True if Mosaic can lower atan2/sin/cos/sqrt inside a Pallas TPU kernel."""
    try:
        f = pl.pallas_call(
            _trans_probe_kernel,
            out_shape=jax.ShapeDtypeStruct((8, 128), jnp.float32),
        )
        jax.jit(f).lower(
            jax.ShapeDtypeStruct((8, 128), jnp.float32),
            jax.ShapeDtypeStruct((8, 128), jnp.float32),
        ).compile()
        return True
    except Exception:
        return False


# --------------------------- pallas wrappers --------------------------------- #

def _pw_conv(x3, w, b):
    n, c, s = x3.shape
    ts = _pick_tile(s, n, n_streams=2, c=c)
    return pl.pallas_call(
        _pw_conv_kernel,
        out_shape=jax.ShapeDtypeStruct(x3.shape, jnp.float32),
        grid=(n, pl.cdiv(s, ts)),
        in_specs=[_row_spec(c, ts), _w_spec(c), _b_spec(c)],
        out_specs=_row_spec(c, ts),
        compiler_params=_cparams(),
    )(x3, w, b.reshape(c, 1))


def _pw_conv_res(x3, res3, w, b):
    n, c, s = x3.shape
    ts = _pick_tile(s, n, n_streams=3, c=c)
    return pl.pallas_call(
        _pw_conv_res_kernel,
        out_shape=jax.ShapeDtypeStruct(x3.shape, jnp.float32),
        grid=(n, pl.cdiv(s, ts)),
        in_specs=[_row_spec(c, ts), _row_spec(c, ts), _w_spec(c), _b_spec(c)],
        out_specs=_row_spec(c, ts),
        compiler_params=_cparams(),
    )(x3, res3, w, b.reshape(c, 1))


def _stacked_weights(params, c):
    wstack = jnp.stack([params["w1a"], params["w1b"], params["w2a"], params["w2b"]])
    bstack = jnp.stack([params["b1a"], params["b1b"], params["b2a"], params["b2b"]])
    return wstack, bstack.reshape(4, c, 1)


def _freq_process(a3, b3, params, fused):
    """fused: inputs are (re, im) -> outputs (re, im).
       not fused: inputs are (mag, pha) -> outputs processed (mag, pha)."""
    n, c, s = a3.shape
    ts = _pick_tile(s, n, n_streams=4, c=c)
    wstack, bstack = _stacked_weights(params, c)
    kernel = _freq_kernel_fused if fused else _freq_kernel_mp
    return pl.pallas_call(
        kernel,
        out_shape=(jax.ShapeDtypeStruct(a3.shape, jnp.float32),
                   jax.ShapeDtypeStruct(a3.shape, jnp.float32)),
        grid=(n, pl.cdiv(s, ts)),
        in_specs=[_row_spec(c, ts), _row_spec(c, ts), _wstack_spec(c), _bstack_spec(c)],
        out_specs=(_row_spec(c, ts), _row_spec(c, ts)),
        compiler_params=_cparams(),
    )(a3, b3, wstack, bstack)


# ------------------------------ FM forward ----------------------------------- #

def fm_forward(x, params):
    """x: (N, C, H, W) float32 -> (N, C, H, W) float32."""
    n, c, h, w = x.shape
    x3 = x.reshape(n, c, h * w)                       # free reshape, channels-first

    # fpre (1x1 conv) — Pallas
    xpre3 = _pw_conv(x3, params["w_fpre"], params["b_fpre"])

    # rfft2 (glue; no Pallas FFT)
    x_freq = jnp.fft.rfft2(xpre3.reshape(n, c, h, w), norm="backward")  # (N,C,H,Wf)
    wf = x_freq.shape[-1]
    sf = h * wf

    if _freq_fused_supported():
        # abs/angle/process1/process2/polar->cartesian fully fused in one kernel.
        re3 = jnp.real(x_freq).reshape(n, c, sf)
        im3 = jnp.imag(x_freq).reshape(n, c, sf)
        re_o3, im_o3 = _freq_process(re3, im3, params, fused=True)
    else:
        # Fallback: mag+pha in ONE XLA fusion (2 kernel input streams, not 3),
        # matmul-only Pallas kernel, polar->cartesian in XLA.
        mag3 = jnp.abs(x_freq).reshape(n, c, sf)
        pha3 = jnp.angle(x_freq).reshape(n, c, sf)
        m3, p3 = _freq_process(mag3, pha3, params, fused=False)
        re_o3 = m3 * jnp.cos(p3)
        im_o3 = m3 * jnp.sin(p3)

    # irfft2 (glue)
    x_out = jnp.fft.irfft2(
        jax.lax.complex(re_o3.reshape(n, c, h, wf), im_o3.reshape(n, c, h, wf)),
        s=(h, w), norm="backward")

    # cat (1x1 conv, nc->nc) fused with the residual add of the original x — Pallas
    out3 = _pw_conv_res(x_out.reshape(n, c, h * w), x3,
                        params["w_cat"], params["b_cat"])
    return out3.reshape(n, c, h, w)


# ------------------------------ parameters ----------------------------------- #

def init_params(key, nc):
    # Conv2d(nc, nc, 1, 1, 0) weights are (nc, nc, 1, 1); stored as (out_c, in_c).
    names = ["fpre", "1a", "1b", "2a", "2b", "cat"]
    keys = jax.random.split(key, 2 * len(names))
    s = 1.0 / float(nc) ** 0.5
    params = {}
    for i, name in enumerate(names):
        wkey, bkey = keys[2 * i], keys[2 * i + 1]
        wname = f"w_{name}" if name in ("fpre", "cat") else f"w{name}"
        bname = f"b_{name}" if name in ("fpre", "cat") else f"b{name}"
        params[wname] = jax.random.uniform(wkey, (nc, nc), jnp.float32, -s, s)
        params[bname] = jax.random.uniform(bkey, (nc,), jnp.float32, -s, s)
    return params


# --------------------------------- main --------------------------------------- #

if __name__ == "__main__":
    nc = 4
    key = jax.random.PRNGKey(0)
    kx, kp = jax.random.split(key)
    x = jax.random.normal(kx, (2, nc, 16, 16), dtype=jnp.float32)
    params = init_params(kp, nc)

    _ = _freq_fused_supported()   # warm the capability probe outside jit

    out = jax.jit(fm_forward)(x, params)
    out = jax.block_until_ready(out)
    assert out.shape == x.shape and out.dtype == jnp.float32
    assert bool(jnp.all(jnp.isfinite(out)))
    print("KERNEL_OK")
</pallas_src>

<mosaic_0001>
module attributes {stable_mosaic.version = 11 : i64} {
  func.func @_pw_conv_kernel(%arg0: i32, %arg1: i32, %arg2: memref<1x4x256xf32, #tpu.memory_space<vmem>>, %arg3: memref<4x4xf32, #tpu.memory_space<vmem>>, %arg4: memref<4x1xf32, #tpu.memory_space<vmem>>, %arg5: memref<1x4x256xf32, #tpu.memory_space<vmem>>) attributes {dimension_semantics = [#tpu.dimension_semantics<parallel>, #tpu.dimension_semantics<parallel>], iteration_bounds = array<i64: 2, 1>, scalar_prefetch = 0 : i64, scratch_operands = 0 : i64, tpu.core_type = #tpu.core_type<tc>, window_params = [{transform_indices = @transform_0, window_bounds = array<i64: 1, 4, 256>}, {pipeline_mode = #tpu.pipeline_mode<synchronous>, transform_indices = @transform_1, window_bounds = array<i64: 4, 4>}, {pipeline_mode = #tpu.pipeline_mode<synchronous>, transform_indices = @transform_2, window_bounds = array<i64: 4, 1>}, {transform_indices = @transform_3, window_bounds = array<i64: 1, 4, 256>}]} {
    %c0 = arith.constant 0 : index
    %c0_0 = arith.constant 0 : index
    %0 = vector.load %arg3[%c0, %c0_0] : memref<4x4xf32, #tpu.memory_space<vmem>>, vector<4x4xf32>
    %c0_1 = arith.constant 0 : index
    %c0_2 = arith.constant 0 : index
    %1 = vector.load %arg4[%c0_1, %c0_2] : memref<4x1xf32, #tpu.memory_space<vmem>>, vector<4x1xf32>
    %c0_3 = arith.constant 0 : index
    %c0_4 = arith.constant 0 : index
    %c0_5 = arith.constant 0 : index
    %2 = vector.load %arg2[%c0_3, %c0_4, %c0_5] : memref<1x4x256xf32, #tpu.memory_space<vmem>>, vector<1x4x256xf32>
    %3 = vector.shape_cast %2 : vector<1x4x256xf32> to vector<4x256xf32>
    %4 = vector.extract_strided_slice %0 {offsets = [0, 0], sizes = [4, 1], strides = [1, 1]} : vector<4x4xf32> to vector<4x1xf32>
    %5 = vector.extract_strided_slice %3 {offsets = [0, 0], sizes = [1, 256], strides = [1, 1]} : vector<4x256xf32> to vector<1x256xf32>
    %6 = vector.broadcast %4 : vector<4x1xf32> to vector<4x256xf32>
    %7 = vector.broadcast %5 : vector<1x256xf32> to vector<4x256xf32>
    %8 = arith.mulf %6, %7 : vector<4x256xf32>
    %9 = vector.extract_strided_slice %0 {offsets = [0, 1], sizes = [4, 1], strides = [1, 1]} : vector<4x4xf32> to vector<4x1xf32>
    %10 = vector.extract_strided_slice %3 {offsets = [1, 0], sizes = [1, 256], strides = [1, 1]} : vector<4x256xf32> to vector<1x256xf32>
    %11 = vector.broadcast %9 : vector<4x1xf32> to vector<4x256xf32>
    %12 = vector.broadcast %10 : vector<1x256xf32> to vector<4x256xf32>
    %13 = arith.mulf %11, %12 : vector<4x256xf32>
    %14 = arith.addf %8, %13 : vector<4x256xf32>
    %15 = vector.extract_strided_slice %0 {offsets = [0, 2], sizes = [4, 1], strides = [1, 1]} : vector<4x4xf32> to vector<4x1xf32>
    %16 = vector.extract_strided_slice %3 {offsets = [2, 0], sizes = [1, 256], strides = [1, 1]} : vector<4x256xf32> to vector<1x256xf32>
    %17 = vector.broadcast %15 : vector<4x1xf32> to vector<4x256xf32>
    %18 = vector.broadcast %16 : vector<1x256xf32> to vector<4x256xf32>
    %19 = arith.mulf %17, %18 : vector<4x256xf32>
    %20 = arith.addf %14, %19 : vector<4x256xf32>
    %21 = vector.extract_strided_slice %0 {offsets = [0, 3], sizes = [4, 1], strides = [1, 1]} : vector<4x4xf32> to vector<4x1xf32>
    %22 = vector.extract_strided_slice %3 {offsets = [3, 0], sizes = [1, 256], strides = [1, 1]} : vector<4x256xf32> to vector<1x256xf32>
    %23 = vector.broadcast %21 : vector<4x1xf32> to vector<4x256xf32>
    %24 = vector.broadcast %22 : vector<1x256xf32> to vector<4x256xf32>
    %25 = arith.mulf %23, %24 : vector<4x256xf32>
    %26 = arith.addf %20, %25 : vector<4x256xf32>
    %27 = vector.broadcast %1 : vector<4x1xf32> to vector<4x256xf32>
    %28 = arith.addf %26, %27 : vector<4x256xf32>
    %c0_6 = arith.constant 0 : index
    %c0_7 = arith.constant 0 : index
    %c0_8 = arith.constant 0 : index
    %29 = vector.load %arg5[%c0_6, %c0_7, %c0_8] : memref<1x4x256xf32, #tpu.memory_space<vmem>>, vector<1x4x256xf32>
    %30 = vector.shape_cast %29 : vector<1x4x256xf32> to vector<4x256xf32>
    %31 = vector.shape_cast %28 : vector<4x256xf32> to vector<1x4x256xf32>
    tpu.vector_store %arg5[%c0_6, %c0_7, %c0_8], %31 {strides = array<i32>} : memref<1x4x256xf32, #tpu.memory_space<vmem>>, vector<1x4x256xf32>,
    return
  }
  func.func @transform_0(%arg0: i32, %arg1: i32) -> (i32, i32, i32) {
    %c0_i32 = arith.constant 0 : i32
    %c0_i32_0 = arith.constant 0 : i32
    return %arg0, %c0_i32, %arg1 : i32, i32, i32
  }
  func.func @transform_1(%arg0: i32, %arg1: i32) -> (i32, i32) {
    %c0_i32 = arith.constant 0 : i32
    %c0_i32_0 = arith.constant 0 : i32
    %c0_i32_1 = arith.constant 0 : i32
    return %c0_i32, %c0_i32_0 : i32, i32
  }
  func.func @transform_2(%arg0: i32, %arg1: i32) -> (i32, i32) {
    %c0_i32 = arith.constant 0 : i32
    %c0_i32_0 = arith.constant 0 : i32
    %c0_i32_1 = arith.constant 0 : i32
    return %c0_i32, %c0_i32_0 : i32, i32
  }
  func.func @transform_3(%arg0: i32, %arg1: i32) -> (i32, i32, i32) {
    %c0_i32 = arith.constant 0 : i32
    %c0_i32_0 = arith.constant 0 : i32
    return %arg0, %c0_i32, %arg1 : i32, i32, i32
  }
}

module attributes {stable_mosaic.version = 11 : i64} {
  func.func @_freq_kernel_mp(%arg0: i32, %arg1: i32, %arg2: memref<1x4x144xf32, #tpu.memory_space<vmem>>, %arg3: memref<1x4x144xf32, #tpu.memory_space<vmem>>, %arg4: memref<4x4x4xf32, #tpu.memory_space<vmem>>, %arg5: memref<4x4x1xf32, #tpu.memory_space<vmem>>, %arg6: memref<1x4x144xf32, #tpu.memory_space<vmem>>, %arg7: memref<1x4x144xf32, #tpu.memory_space<vmem>>) attributes {dimension_semantics = [#tpu.dimension_semantics<parallel>, #tpu.dimension_semantics<parallel>], iteration_bounds = array<i64: 2, 1>, scalar_prefetch = 0 : i64, scratch_operands = 0 : i64, tpu.core_type = #tpu.core_type<tc>, window_params = [{transform_indices = @transform_0, window_bounds = array<i64: 1, 4, 144>}, {transform_indices = @transform_1, window_bounds = array<i64: 1, 4, 144>}, {pipeline_mode = #tpu.pipeline_mode<synchronous>, transform_indices = @transform_2, window_bounds = array<i64: 4, 4, 4>}, {pipeline_mode = #tpu.pipeline_mode<synchronous>, transform_indices = @transform_3, window_bounds = array<i64: 4, 4, 1>}, {transform_indices = @transform_4, window_bounds = array<i64: 1, 4, 144>}, {transform_indices = @transform_5, window_bounds = array<i64: 1, 4, 144>}]} {
    %c0 = arith.constant 0 : index
    %c0_0 = arith.constant 0 : index
    %c0_1 = arith.constant 0 : index
    %0 = vector.load %arg4[%c0, %c0_0, %c0_1] : memref<4x4x4xf32, #tpu.memory_space<vmem>>, vector<1x4x4xf32>
    %1 = vector.shape_cast %0 : vector<1x4x4xf32> to vector<4x4xf32>
    %c0_2 = arith.constant 0 : index
    %c0_3 = arith.constant 0 : index
    %c0_4 = arith.constant 0 : index
    %2 = vector.load %arg5[%c0_2, %c0_3, %c0_4] : memref<4x4x1xf32, #tpu.memory_space<vmem>>, vector<1x4x1xf32>
    %3 = vector.shape_cast %2 : vector<1x4x1xf32> to vector<4x1xf32>
    %c0_5 = arith.constant 0 : index
    %c0_6 = arith.constant 0 : index
    %c0_7 = arith.constant 0 : index
    %4 = vector.load %arg2[%c0_5, %c0_6, %c0_7] : memref<1x4x144xf32, #tpu.memory_space<vmem>>, vector<1x4x144xf32>
    %5 = vector.shape_cast %4 : vector<1x4x144xf32> to vector<4x144xf32>
    %6 = vector.extract_strided_slice %1 {offsets = [0, 0], sizes = [4, 1], strides = [1, 1]} : vector<4x4xf32> to vector<4x1xf32>
    %7 = vector.extract_strided_slice %5 {offsets = [0, 0], sizes = [1, 144], strides = [1, 1]} : vector<4x144xf32> to vector<1x144xf32>
    %8 = vector.broadcast %6 : vector<4x1xf32> to vector<4x144xf32>
    %9 = vector.broadcast %7 : vector<1x144xf32> to vector<4x144xf32>
    %10 = arith.mulf %8, %9 : vector<4x144xf32>
    %11 = vector.extract_strided_slice %1 {offsets = [0, 1], sizes = [4, 1], strides = [1, 1]} : vector<4x4xf32> to vector<4x1xf32>
    %12 = vector.extract_strided_slice %5 {offsets = [1, 0], sizes = [1, 144], strides = [1, 1]} : vector<4x144xf32> to vector<1x144xf32>
    %13 = vector.broadcast %11 : vector<4x1xf32> to vector<4x144xf32>
    %14 = vector.broadcast %12 : vector<1x144xf32> to vector<4x144xf32>
    %15 = arith.mulf %13, %14 : vector<4x144xf32>
    %16 = arith.addf %10, %15 : vector<4x144xf32>
    %17 = vector.extract_strided_slice %1 {offsets = [0, 2], sizes = [4, 1], strides = [1, 1]} : vector<4x4xf32> to vector<4x1xf32>
    %18 = vector.extract_strided_slice %5 {offsets = [2, 0], sizes = [1, 144], strides = [1, 1]} : vector<4x144xf32> to vector<1x144xf32>
    %19 = vector.broadcast %17 : vector<4x1xf32> to vector<4x144xf32>
    %20 = vector.broadcast %18 : vector<1x144xf32> to vector<4x144xf32>
    %21 = arith.mulf %19, %20 : vector<4x144xf32>
    %22 = arith.addf %16, %21 : vector<4x144xf32>
    %23 = vector.extract_strided_slice %1 {offsets = [0, 3], sizes = [4, 1], strides = [1, 1]} : vector<4x4xf32> to vector<4x1xf32>
    %24 = vector.extract_strided_slice %5 {offsets = [3, 0], sizes = [1, 144], strides = [1, 1]} : vector<4x144xf32> to vector<1x144xf32>
    %25 = vector.broadcast %23 : vector<4x1xf32> to vector<4x144xf32>
    %26 = vector.broadcast %24 : vector<1x144xf32> to vector<4x144xf32>
    %27 = arith.mulf %25, %26 : vector<4x144xf32>
    %28 = arith.addf %22, %27 : vector<4x144xf32>
    %29 = vector.broadcast %3 : vector<4x1xf32> to vector<4x144xf32>
    %30 = arith.addf %28, %29 : vector<4x144xf32>
    %cst = arith.constant 0.000000e+00 : f32
    %31 = vector.broadcast %cst : f32 to vector<4x144xf32>
    %32 = arith.cmpf oge, %30, %31 : vector<4x144xf32>
    %cst_8 = arith.constant 1.000000e-01 : f32
    %33 = vector.broadcast %cst_8 : f32 to vector<4x144xf32>
    %34 = arith.mulf %33, %30 : vector<4x144xf32>
    %35 = arith.select %32, %30, %34 : vector<4x144xi1>, vector<4x144xf32>
    %c1 = arith.constant 1 : index
    %c0_9 = arith.constant 0 : index
    %c0_10 = arith.constant 0 : index
    %36 = vector.load %arg4[%c1, %c0_9, %c0_10] : memref<4x4x4xf32, #tpu.memory_space<vmem>>, vector<1x4x4xf32>
    %37 = vector.shape_cast %36 : vector<1x4x4xf32> to vector<4x4xf32>
    %c1_11 = arith.constant 1 : index
    %c0_12 = arith.constant 0 : index
    %c0_13 = arith.constant 0 : index
    %38 = vector.load %arg5[%c1_11, %c0_12, %c0_13] : memref<4x4x1xf32, #tpu.memory_space<vmem>>, vector<1x4x1xf32>
    %39 = vector.shape_cast %38 : vector<1x4x1xf32> to vector<4x1xf32>
    %40 = vector.extract_strided_slice %37 {offsets = [0, 0], sizes = [4, 1], strides = [1, 1]} : vector<4x4xf32> to vector<4x1xf32>
    %41 = vector.extract_strided_slice %35 {offsets = [0, 0], sizes = [1, 144], strides = [1, 1]} : vector<4x144xf32> to vector<1x144xf32>
    %42 = vector.broadcast %40 : vector<4x1xf32> to vector<4x144xf32>
    %43 = vector.broadcast %41 : vector<1x144xf32> to vector<4x144xf32>
    %44 = arith.mulf %42, %43 : vector<4x144xf32>
    %45 = vector.extract_strided_slice %37 {offsets = [0, 1], sizes = [4, 1], strides = [1, 1]} : vector<4x4xf32> to vector<4x1xf32>
    %46 = vector.extract_strided_slice %35 {offsets = [1, 0], sizes = [1, 144], strides = [1, 1]} : vector<4x144xf32> to vector<1x144xf32>
    %47 = vector.broadcast %45 : vector<4x1xf32> to vector<4x144xf32>
    %48 = vector.broadcast %46 : vector<1x144xf32> to vector<4x144xf32>
    %49 = arith.mulf %47, %48 : vector<4x144xf32>
    %50 = arith.addf %44, %49 : vector<4x144xf32>
    %51 = vector.extract_strided_slice %37 {offsets = [0, 2], sizes = [4, 1], strides = [1, 1]} : vector<4x4xf32> to vector<4x1xf32>
    %52 = vector.extract_strided_slice %35 {offsets = [2, 0], sizes = [1, 144], strides = [1, 1]} : vector<4x144xf32> to vector<1x144xf32>
    %53 = vector.broadcast %51 : vector<4x1xf32> to vector<4x144xf32>
    %54 = vector.broadcast %52 : vector<1x144xf32> to vector<4x144xf32>
    %55 = arith.mulf %53, %54 : vector<4x144xf32>
    %56 = arith.addf %50, %55 : vector<4x144xf32>
    %57 = vector.extract_strided_slice %37 {offsets = [0, 3], sizes = [4, 1], strides = [1, 1]} : vector<4x4xf32> to vector<4x1xf32>
    %58 = vector.extract_strided_slice %35 {offsets = [3, 0], sizes = [1, 144], strides = [1, 1]} : vector<4x144xf32> to vector<1x144xf32>
    %59 = vector.broadcast %57 : vector<4x1xf32> to vector<4x144xf32>
    %60 = vector.broadcast %58 : vector<1x144xf32> to vector<4x144xf32>
    %61 = arith.mulf %59, %60 : vector<4x144xf32>
    %62 = arith.addf %56, %61 : vector<4x144xf32>
    %63 = vector.broadcast %39 : vector<4x1xf32> to vector<4x144xf32>
    %64 = arith.addf %62, %63 : vector<4x144xf32>
    %c0_14 = arith.constant 0 : index
    %c0_15 = arith.constant 0 : index
    %c0_16 = arith.constant 0 : index
    %65 = vector.load %arg6[%c0_14, %c0_15, %c0_16] : memref<1x4x144xf32, #tpu.memory_space<vmem>>, vector<1x4x144xf32>
    %66 = vector.shape_cast %65 : vector<1x4x144xf32> to vector<4x144xf32>
    %67 = vector.shape_cast %64 : vector<4x144xf32> to vector<1x4x144xf32>
    tpu.vector_store %arg6[%c0_14, %c0_15, %c0_16], %67 {strides = array<i32>} : memref<1x4x144xf32, #tpu.memory_space<vmem>>, vector<1x4x144xf32>,
    %c2 = arith.constant 2 : index
    %c0_17 = arith.constant 0 : index
    %c0_18 = arith.constant 0 : index
    %68 = vector.load %arg4[%c2, %c0_17, %c0_18] : memref<4x4x4xf32, #tpu.memory_space<vmem>>, vector<1x4x4xf32>
    %69 = vector.shape_cast %68 : vector<1x4x4xf32> to vector<4x4xf32>
    %c2_19 = arith.constant 2 : index
    %c0_20 = arith.constant 0 : index
    %c0_21 = arith.constant 0 : index
    %70 = vector.load %arg5[%c2_19, %c0_20, %c0_21] : memref<4x4x1xf32, #tpu.memory_space<vmem>>, vector<1x4x1xf32>
    %71 = vector.shape_cast %70 : vector<1x4x1xf32> to vector<4x1xf32>
    %c0_22 = arith.constant 0 : index
    %c0_23 = arith.constant 0 : index
    %c0_24 = arith.constant 0 : index
    %72 = vector.load %arg3[%c0_22, %c0_23, %c0_24] : memref<1x4x144xf32, #tpu.memory_space<vmem>>, vector<1x4x144xf32>
    %73 = vector.shape_cast %72 : vector<1x4x144xf32> to vector<4x144xf32>
    %74 = vector.extract_strided_slice %69 {offsets = [0, 0], sizes = [4, 1], strides = [1, 1]} : vector<4x4xf32> to vector<4x1xf32>
    %75 = vector.extract_strided_slice %73 {offsets = [0, 0], sizes = [1, 144], strides = [1, 1]} : vector<4x144xf32> to vector<1x144xf32>
    %76 = vector.broadcast %74 : vector<4x1xf32> to vector<4x144xf32>
    %77 = vector.broadcast %75 : vector<1x144xf32> to vector<4x144xf32>
    %78 = arith.mulf %76, %77 : vector<4x144xf32>
    %79 = vector.extract_strided_slice %69 {offsets = [0, 1], sizes = [4, 1], strides = [1, 1]} : vector<4x4xf32> to vector<4x1xf32>
    %80 = vector.extract_strided_slice %73 {offsets = [1, 0], sizes = [1, 144], strides = [1, 1]} : vector<4x144xf32> to vector<1x144xf32>
    %81 = vector.broadcast %79 : vector<4x1xf32> to vector<4x144xf32>
    %82 = vector.broadcast %80 : vector<1x144xf32> to vector<4x144xf32>
    %83 = arith.mulf %81, %82 : vector<4x144xf32>
    %84 = arith.addf %78, %83 : vector<4x144xf32>
    %85 = vector.extract_strided_slice %69 {offsets = [0, 2], sizes = [4, 1], strides = [1, 1]} : vector<4x4xf32> to vector<4x1xf32>
    %86 = vector.extract_strided_slice %73 {offsets = [2, 0], sizes = [1, 144], strides = [1, 1]} : vector<4x144xf32> to vector<1x144xf32>
    %87 = vector.broadcast %85 : vector<4x1xf32> to vector<4x144xf32>
    %88 = vector.broadcast %86 : vector<1x144xf32> to vector<4x144xf32>
    %89 = arith.mulf %87, %88 : vector<4x144xf32>
    %90 = arith.addf %84, %89 : vector<4x144xf32>
    %91 = vector.extract_strided_slice %69 {offsets = [0, 3], sizes = [4, 1], strides = [1, 1]} : vector<4x4xf32> to vector<4x1xf32>
    %92 = vector.extract_strided_slice %73 {offsets = [3, 0], sizes = [1, 144], strides = [1, 1]} : vector<4x144xf32> to vector<1x144xf32>
    %93 = vector.broadcast %91 : vector<4x1xf32> to vector<4x144xf32>
    %94 = vector.broadcast %92 : vector<1x144xf32> to vector<4x144xf32>
    %95 = arith.mulf %93, %94 : vector<4x144xf32>
    %96 = arith.addf %90, %95 : vector<4x144xf32>
    %97 = vector.broadcast %71 : vector<4x1xf32> to vector<4x144xf32>
    %98 = arith.addf %96, %97 : vector<4x144xf32>
    %cst_25 = arith.constant 0.000000e+00 : f32
    %99 = vector.broadcast %cst_25 : f32 to vector<4x144xf32>
    %100 = arith.cmpf oge, %98, %99 : vector<4x144xf32>
    %cst_26 = arith.constant 1.000000e-01 : f32
    %101 = vector.broadcast %cst_26 : f32 to vector<4x144xf32>
    %102 = arith.mulf %101, %98 : vector<4x144xf32>
    %103 = arith.select %100, %98, %102 : vector<4x144xi1>, vector<4x144xf32>
    %c3 = arith.constant 3 : index
    %c0_27 = arith.constant 0 : index
    %c0_28 = arith.constant 0 : index
    %104 = vector.load %arg4[%c3, %c0_27, %c0_28] : memref<4x4x4xf32, #tpu.memory_space<vmem>>, vector<1x4x4xf32>
    %105 = vector.shape_cast %104 : vector<1x4x4xf32> to vector<4x4xf32>
    %c3_29 = arith.constant 3 : index
    %c0_30 = arith.constant 0 : index
    %c0_31 = arith.constant 0 : index
    %106 = vector.load %arg5[%c3_29, %c0_30, %c0_31] : memref<4x4x1xf32, #tpu.memory_space<vmem>>, vector<1x4x1xf32>
    %107 = vector.shape_cast %106 : vector<1x4x1xf32> to vector<4x1xf32>
    %108 = vector.extract_strided_slice %105 {offsets = [0, 0], sizes = [4, 1], strides = [1, 1]} : vector<4x4xf32> to vector<4x1xf32>
    %109 = vector.extract_strided_slice %103 {offsets = [0, 0], sizes = [1, 144], strides = [1, 1]} : vector<4x144xf32> to vector<1x144xf32>
    %110 = vector.broadcast %108 : vector<4x1xf32> to vector<4x144xf32>
    %111 = vector.broadcast %109 : vector<1x144xf32> to vector<4x144xf32>
    %112 = arith.mulf %110, %111 : vector<4x144xf32>
    %113 = vector.extract_strided_slice %105 {offsets = [0, 1], sizes = [4, 1], strides = [1, 1]} : vector<4x4xf32> to vector<4x1xf32>
    %114 = vector.extract_strided_slice %103 {offsets = [1, 0], sizes = [1, 144], strides = [1, 1]} : vector<4x144xf32> to vector<1x144xf32>
    %115 = vector.broadcast %113 : vector<4x1xf32> to vector<4x144xf32>
    %116 = vector.broadcast %114 : vector<1x144xf32> to vector<4x144xf32>
    %117 = arith.mulf %115, %116 : vector<4x144xf32>
    %118 = arith.addf %112, %117 : vector<4x144xf32>
    %119 = vector.extract_strided_slice %105 {offsets = [0, 2], sizes = [4, 1], strides = [1, 1]} : vector<4x4xf32> to vector<4x1xf32>
    %120 = vector.extract_strided_slice %103 {offsets = [2, 0], sizes = [1, 144], strides = [1, 1]} : vector<4x144xf32> to vector<1x144xf32>
    %121 = vector.broadcast %119 : vector<4x1xf32> to vector<4x144xf32>
    %122 = vector.broadcast %120 : vector<1x144xf32> to vector<4x144xf32>
    %123 = arith.mulf %121, %122 : vector<4x144xf32>
    %124 = arith.addf %118, %123 : vector<4x144xf32>
    %125 = vector.extract_strided_slice %105 {offsets = [0, 3], sizes = [4, 1], strides = [1, 1]} : vector<4x4xf32> to vector<4x1xf32>
    %126 = vector.extract_strided_slice %103 {offsets = [3, 0], sizes = [1, 144], strides = [1, 1]} : vector<4x144xf32> to vector<1x144xf32>
    %127 = vector.broadcast %125 : vector<4x1xf32> to vector<4x144xf32>
    %128 = vector.broadcast %126 : vector<1x144xf32> to vector<4x144xf32>
    %129 = arith.mulf %127, %128 : vector<4x144xf32>
    %130 = arith.addf %124, %129 : vector<4x144xf32>
    %131 = vector.broadcast %107 : vector<4x1xf32> to vector<4x144xf32>
    %132 = arith.addf %130, %131 : vector<4x144xf32>
    %c0_32 = arith.constant 0 : index
    %c0_33 = arith.constant 0 : index
    %c0_34 = arith.constant 0 : index
    %133 = vector.load %arg7[%c0_32, %c0_33, %c0_34] : memref<1x4x144xf32, #tpu.memory_space<vmem>>, vector<1x4x144xf32>
    %134 = vector.shape_cast %133 : vector<1x4x144xf32> to vector<4x144xf32>
    %135 = vector.shape_cast %132 : vector<4x144xf32> to vector<1x4x144xf32>
    tpu.vector_store %arg7[%c0_32, %c0_33, %c0_34], %135 {strides = array<i32>} : memref<1x4x144xf32, #tpu.memory_space<vmem>>, vector<1x4x144xf32>,
    return
  }
  func.func @transform_0(%arg0: i32, %arg1: i32) -> (i32, i32, i32) {
    %c0_i32 = arith.constant 0 : i32
    %c0_i32_0 = arith.constant 0 : i32
    return %arg0, %c0_i32, %arg1 : i32, i32, i32
  }
  func.func @transform_1(%arg0: i32, %arg1: i32) -> (i32, i32, i32) {
    %c0_i32 = arith.constant 0 : i32
    %c0_i32_0 = arith.constant 0 : i32
    return %arg0, %c0_i32, %arg1 : i32, i32, i32
  }
  func.func @transform_2(%arg0: i32, %arg1: i32) -> (i32, i32, i32) {
    %c0_i32 = arith.constant 0 : i32
    %c0_i32_0 = arith.constant 0 : i32
    %c0_i32_1 = arith.constant 0 : i32
    %c0_i32_2 = arith.constant 0 : i32
    return %c0_i32, %c0_i32_0, %c0_i32_1 : i32, i32, i32
  }
  func.func @transform_3(%arg0: i32, %arg1: i32) -> (i32, i32, i32) {
    %c0_i32 = arith.constant 0 : i32
    %c0_i32_0 = arith.constant 0 : i32
    %c0_i32_1 = arith.constant 0 : i32
    %c0_i32_2 = arith.constant 0 : i32
    return %c0_i32, %c0_i32_0, %c0_i32_1 : i32, i32, i32
  }
  func.func @transform_4(%arg0: i32, %arg1: i32) -> (i32, i32, i32) {
    %c0_i32 = arith.constant 0 : i32
    %c0_i32_0 = arith.constant 0 : i32
    return %arg0, %c0_i32, %arg1 : i32, i32, i32
  }
  func.func @transform_5(%arg0: i32, %arg1: i32) -> (i32, i32, i32) {
    %c0_i32 = arith.constant 0 : i32
    %c0_i32_0 = arith.constant 0 : i32
    return %arg0, %c0_i32, %arg1 : i32, i32, i32
  }
}

module attributes {stable_mosaic.version = 11 : i64} {
  func.func @_pw_conv_res_kernel(%arg0: i32, %arg1: i32, %arg2: memref<1x4x256xf32, #tpu.memory_space<vmem>>, %arg3: memref<1x4x256xf32, #tpu.memory_space<vmem>>, %arg4: memref<4x4xf32, #tpu.memory_space<vmem>>, %arg5: memref<4x1xf32, #tpu.memory_space<vmem>>, %arg6: memref<1x4x256xf32, #tpu.memory_space<vmem>>) attributes {dimension_semantics = [#tpu.dimension_semantics<parallel>, #tpu.dimension_semantics<parallel>], iteration_bounds = array<i64: 2, 1>, scalar_prefetch = 0 : i64, scratch_operands = 0 : i64, tpu.core_type = #tpu.core_type<tc>, window_params = [{transform_indices = @transform_0, window_bounds = array<i64: 1, 4, 256>}, {transform_indices = @transform_1, window_bounds = array<i64: 1, 4, 256>}, {pipeline_mode = #tpu.pipeline_mode<synchronous>, transform_indices = @transform_2, window_bounds = array<i64: 4, 4>}, {pipeline_mode = #tpu.pipeline_mode<synchronous>, transform_indices = @transform_3, window_bounds = array<i64: 4, 1>}, {transform_indices = @transform_4, window_bounds = array<i64: 1, 4, 256>}]} {
    %c0 = arith.constant 0 : index
    %c0_0 = arith.constant 0 : index
    %0 = vector.load %arg4[%c0, %c0_0] : memref<4x4xf32, #tpu.memory_space<vmem>>, vector<4x4xf32>
    %c0_1 = arith.constant 0 : index
    %c0_2 = arith.constant 0 : index
    %1 = vector.load %arg5[%c0_1, %c0_2] : memref<4x1xf32, #tpu.memory_space<vmem>>, vector<4x1xf32>
    %c0_3 = arith.constant 0 : index
    %c0_4 = arith.constant 0 : index
    %c0_5 = arith.constant 0 : index
    %2 = vector.load %arg2[%c0_3, %c0_4, %c0_5] : memref<1x4x256xf32, #tpu.memory_space<vmem>>, vector<1x4x256xf32>
    %3 = vector.shape_cast %2 : vector<1x4x256xf32> to vector<4x256xf32>
    %4 = vector.extract_strided_slice %0 {offsets = [0, 0], sizes = [4, 1], strides = [1, 1]} : vector<4x4xf32> to vector<4x1xf32>
    %5 = vector.extract_strided_slice %3 {offsets = [0, 0], sizes = [1, 256], strides = [1, 1]} : vector<4x256xf32> to vector<1x256xf32>
    %6 = vector.broadcast %4 : vector<4x1xf32> to vector<4x256xf32>
    %7 = vector.broadcast %5 : vector<1x256xf32> to vector<4x256xf32>
    %8 = arith.mulf %6, %7 : vector<4x256xf32>
    %9 = vector.extract_strided_slice %0 {offsets = [0, 1], sizes = [4, 1], strides = [1, 1]} : vector<4x4xf32> to vector<4x1xf32>
    %10 = vector.extract_strided_slice %3 {offsets = [1, 0], sizes = [1, 256], strides = [1, 1]} : vector<4x256xf32> to vector<1x256xf32>
    %11 = vector.broadcast %9 : vector<4x1xf32> to vector<4x256xf32>
    %12 = vector.broadcast %10 : vector<1x256xf32> to vector<4x256xf32>
    %13 = arith.mulf %11, %12 : vector<4x256xf32>
    %14 = arith.addf %8, %13 : vector<4x256xf32>
    %15 = vector.extract_strided_slice %0 {offsets = [0, 2], sizes = [4, 1], strides = [1, 1]} : vector<4x4xf32> to vector<4x1xf32>
    %16 = vector.extract_strided_slice %3 {offsets = [2, 0], sizes = [1, 256], strides = [1, 1]} : vector<4x256xf32> to vector<1x256xf32>
    %17 = vector.broadcast %15 : vector<4x1xf32> to vector<4x256xf32>
    %18 = vector.broadcast %16 : vector<1x256xf32> to vector<4x256xf32>
    %19 = arith.mulf %17, %18 : vector<4x256xf32>
    %20 = arith.addf %14, %19 : vector<4x256xf32>
    %21 = vector.extract_strided_slice %0 {offsets = [0, 3], sizes = [4, 1], strides = [1, 1]} : vector<4x4xf32> to vector<4x1xf32>
    %22 = vector.extract_strided_slice %3 {offsets = [3, 0], sizes = [1, 256], strides = [1, 1]} : vector<4x256xf32> to vector<1x256xf32>
    %23 = vector.broadcast %21 : vector<4x1xf32> to vector<4x256xf32>
    %24 = vector.broadcast %22 : vector<1x256xf32> to vector<4x256xf32>
    %25 = arith.mulf %23, %24 : vector<4x256xf32>
    %26 = arith.addf %20, %25 : vector<4x256xf32>
    %27 = vector.broadcast %1 : vector<4x1xf32> to vector<4x256xf32>
    %28 = arith.addf %26, %27 : vector<4x256xf32>
    %c0_6 = arith.constant 0 : index
    %c0_7 = arith.constant 0 : index
    %c0_8 = arith.constant 0 : index
    %29 = vector.load %arg3[%c0_6, %c0_7, %c0_8] : memref<1x4x256xf32, #tpu.memory_space<vmem>>, vector<1x4x256xf32>
    %30 = vector.shape_cast %29 : vector<1x4x256xf32> to vector<4x256xf32>
    %31 = arith.addf %28, %30 : vector<4x256xf32>
    %c0_9 = arith.constant 0 : index
    %c0_10 = arith.constant 0 : index
    %c0_11 = arith.constant 0 : index
    %32 = vector.load %arg6[%c0_9, %c0_10, %c0_11] : memref<1x4x256xf32, #tpu.memory_space<vmem>>, vector<1x4x256xf32>
    %33 = vector.shape_cast %32 : vector<1x4x256xf32> to vector<4x256xf32>
    %34 = vector.shape_cast %31 : vector<4x256xf32> to vector<1x4x256xf32>
    tpu.vector_store %arg6[%c0_9, %c0_10, %c0_11], %34 {strides = array<i32>} : memref<1x4x256xf32, #tpu.memory_space<vmem>>, vector<1x4x256xf32>,
    return
  }
  func.func @transform_0(%arg0: i32, %arg1: i32) -> (i32, i32, i32) {
    %c0_i32 = arith.constant 0 : i32
    %c0_i32_0 = arith.constant 0 : i32
    return %arg0, %c0_i32, %arg1 : i32, i32, i32
  }
  func.func @transform_1(%arg0: i32, %arg1: i32) -> (i32, i32, i32) {
    %c0_i32 = arith.constant 0 : i32
    %c0_i32_0 = arith.constant 0 : i32
    return %arg0, %c0_i32, %arg1 : i32, i32, i32
  }
  func.func @transform_2(%arg0: i32, %arg1: i32) -> (i32, i32) {
    %c0_i32 = arith.constant 0 : i32
    %c0_i32_0 = arith.constant 0 : i32
    %c0_i32_1 = arith.constant 0 : i32
    return %c0_i32, %c0_i32_0 : i32, i32
  }
  func.func @transform_3(%arg0: i32, %arg1: i32) -> (i32, i32) {
    %c0_i32 = arith.constant 0 : i32
    %c0_i32_0 = arith.constant 0 : i32
    %c0_i32_1 = arith.constant 0 : i32
    return %c0_i32, %c0_i32_0 : i32, i32
  }
  func.func @transform_4(%arg0: i32, %arg1: i32) -> (i32, i32, i32) {
    %c0_i32 = arith.constant 0 : i32
    %c0_i32_0 = arith.constant 0 : i32
    return %arg0, %c0_i32, %arg1 : i32, i32, i32
  }
}

</mosaic_0001>

<llo_original>
// kernel: fm_forward.3
$region0: #{fm_forward.3}
  #allocation0 [shape = 'u32[]', space=smem, size = 0x4, offset = 0x4, fixed_abs, tag = 'smem constant byte address 0x4 - core index']
  #allocation1 [shape = 'u32[144,128]{1,0:T(1,128)}', space=vmem, size = 0x12000, scoped, tag = 'internal scratch']
  %s0 = inlined_call_operand.vmem [shape: f32[2,4,256], index: 0, kind: input, shape index: {}]
  %s1 = inlined_call_operand.vmem [shape: f32[4,4], index: 1, kind: input, shape index: {}]
  %s2 = inlined_call_operand.vmem [shape: f32[4,1], index: 2, kind: input, shape index: {}]
  %s3 = inlined_call_operand.vmem [shape: f32[2,4,256], index: 3, kind: output, shape index: {}]
  %s4 = sld [smem:[#allocation0]]
  $region45: #{fm_forward.3} parent=0
    _
  %s6 = ssub.s32 1, %s4
  %s7 = scalar_select 0, %s6, %s4
  loop: start=0, step=1, limit=4
  $region2: #{fm_forward.3} parent=0 // loop_pre_header
    _
  $region3: #{fm_forward.3} parent=0 // loop_header
    %s9 = sphi 0, %s13
    %p10 = scmp.ge.s32.totalorder %s9, 4
    %s16 = sphi 0, %s28
    %s17 = sphi 0, %s24
    %s18 = sphi 0, %s16
    %s19 = sphi 0, %s17
    %s20 = sphi 0, %s18
    %s21 = sphi 0, %s19
    %s33 = sphi 0, %s35
    %s36 = sphi 0, %s33
    %s37 = sphi 0, %s36
    %s53 = sphi 0, %s37
    %s57 = sphi 0, %s57
    %s59 = sphi 0, %s57
    %s60 = sphi 0, %s59
    %s74 = sphi 0, %s60
    %s78 = sphi 0, %s78
    %s80 = sphi 0, %s78
    %s81 = sphi 0, %s80
    %s95 = sphi 0, %s81
    %s103 = sphi 0, %s105
    %s106 = sphi 0, %s103
    %s107 = sphi 0, %s106
    %s123 = sphi 0, %s107
  $region4: #{fm_forward.3} parent=0 // loop_header_branch
    %12 = sbr.rel (%p10) target = $region8
  $region5: #{fm_forward.3} parent=0 // loop_body
    %s14 = ssub.s32 %s9, 1
    %s15 = ssub.s32 %s9, 2
    %s22 = sadd.s32 1, %s17
    %p23 = scmp.ge.s32.totalorder %s22, 1
    %s24 = scalar_select %p23, 0, %s22
    %s25 = sadd.s32 1, %s16
    %s26 = scalar_select %p23, %s25, %s16
    %p27 = scmp.ge.s32.totalorder %s26, 2
    %s28 = scalar_select %p27, 0, %s26
    %s29 = ssub.s32 %s16, %s28
    %s30 = ssub.s32 %s17, %s24
    %s31 = sor.u32 %s29, %s30
    %p32 = scmp.eq.s32.totalorder %s31, 0
    %s34 = sadd.s32 %s33, 1
    %s35 = scalar_select %p32, %s33, %s34
    %p38 = pneg %p32
    %p39 = scmp.eq.s32.totalorder %s9, 1
    %p40 = por %p38, %p39
    %p41 = scmp.ne.s32.totalorder %s33, %s36
    %p42 = scmp.eq.s32.totalorder %s9, 0
    %p43 = por %p41, %p42
    %p44 = scmp.ne.s32.totalorder %s33, %s36
    %p45 = scmp.eq.s32.totalorder %s14, 1
    %p46 = por %p44, %p45
    %p47 = scmp.ne.s32.totalorder %s36, %s37
    %p48 = scmp.eq.s32.totalorder %s14, 0
    %p49 = por %p47, %p48
    %p50 = scmp.ne.s32.totalorder %s36, %s37
    %p51 = scmp.eq.s32.totalorder %s15, 1
    %p52 = por %p50, %p51
    %p54 = scmp.ne.s32.totalorder %s37, %s53
    %p55 = scmp.eq.s32.totalorder %s15, 0
    %p56 = por %p54, %p55
    %s58 = sadd.s32 %s57, 1
    %p61 = scmp.eq.s32.totalorder %s9, 1
    %p62 = scmp.ne.s32.totalorder %s57, %s59
    %p63 = scmp.eq.s32.totalorder %s9, 0
    %p64 = por %p62, %p63
    %p65 = scmp.ne.s32.totalorder %s57, %s59
    %p66 = scmp.eq.s32.totalorder %s14, 1
    %p67 = por %p65, %p66
    %p68 = scmp.ne.s32.totalorder %s59, %s60
    %p69 = scmp.eq.s32.totalorder %s14, 0
    %p70 = por %p68, %p69
    %p71 = scmp.ne.s32.totalorder %s59, %s60
    %p72 = scmp.eq.s32.totalorder %s15, 1
    %p73 = por %p71, %p72
    %p75 = scmp.ne.s32.totalorder %s60, %s74
    %p76 = scmp.eq.s32.totalorder %s15, 0
    %p77 = por %p75, %p76
    %s79 = sadd.s32 %s78, 1
    %p82 = scmp.eq.s32.totalorder %s9, 1
    %p83 = scmp.ne.s32.totalorder %s78, %s80
    %p84 = scmp.eq.s32.totalorder %s9, 0
    %p85 = por %p83, %p84
    %p86 = scmp.ne.s32.totalorder %s78, %s80
    %p87 = scmp.eq.s32.totalorder %s14, 1
    %p88 = por %p86, %p87
    %p89 = scmp.ne.s32.totalorder %s80, %s81
    %p90 = scmp.eq.s32.totalorder %s14, 0
    %p91 = por %p89, %p90
    %p92 = scmp.ne.s32.totalorder %s80, %s81
    %p93 = scmp.eq.s32.totalorder %s15, 1
    %p94 = por %p92, %p93
    %p96 = scmp.ne.s32.totalorder %s81, %s95
    %p97 = scmp.eq.s32.totalorder %s15, 0
    %p98 = por %p96, %p97
    %s99 = ssub.s32 %s16, %s28
    %s100 = ssub.s32 %s17, %s24
    %s101 = sor.u32 %s99, %s100
    %p102 = scmp.eq.s32.totalorder %s101, 0
    %s104 = sadd.s32 %s103, 1
    %s105 = scalar_select %p102, %s103, %s104
    %p108 = pneg %p102
    %p109 = scmp.eq.s32.totalorder %s9, 1
    %p110 = por %p108, %p109
    %p111 = scmp.ne.s32.totalorder %s103, %s106
    %p112 = scmp.eq.s32.totalorder %s9, 0
    %p113 = por %p111, %p112
    %p114 = scmp.ne.s32.totalorder %s103, %s106
    %p115 = scmp.eq.s32.totalorder %s14, 1
    %p116 = por %p114, %p115
    %p117 = scmp.ne.s32.totalorder %s106, %s107
    %p118 = scmp.eq.s32.totalorder %s14, 0
    %p119 = por %p117, %p118
    %p120 = scmp.ne.s32.totalorder %s106, %s107
    %p121 = scmp.eq.s32.totalorder %s15, 1
    %p122 = por %p120, %p121
    %p124 = scmp.ne.s32.totalorder %s107, %s123
    %p125 = scmp.eq.s32.totalorder %s15, 0
    %p126 = por %p124, %p125
    %p127 = scmp.le.s32.totalorder 1, %s9
    %p128 = scmp.lt.s32.totalorder %s9, 3
    %p129 = pnand %p127, %p128
    %p130 = pneg %p129
    // Predicated region
    $region9: #{fm_forward.3} parent=5 // pred_check
      _
    $region10: #{fm_forward.3} parent=5 // pred_check_branch
      %132 = sbr.rel (%p129) target = $region12
    $region11: #{fm_forward.3} parent=5 // pred_region
      %s133 = ssub.s32 %s9, 1
      // Predicated region
      $region13: #{fm_forward.3} parent=11 // pred_check
        %p134 = pneg %p70
      $region14: #{fm_forward.3} parent=11 // pred_check_branch
        %136 = sbr.rel (%p134) target = $region16
      $region15: #{fm_forward.3} parent=11 // pred_region
        _
      $region16: #{fm_forward.3} parent=11 // pred_fallthru
        _
      // Predicated region
      $region17: #{fm_forward.3} parent=11 // pred_check
        %p137 = pneg %p91
      $region18: #{fm_forward.3} parent=11 // pred_check_branch
        %139 = sbr.rel (%p137) target = $region20
      $region19: #{fm_forward.3} parent=11 // pred_region
        _
      $region20: #{fm_forward.3} parent=11 // pred_fallthru
        _
    $region12: #{fm_forward.3} parent=5 // pred_fallthru
      _
    %p140 = scmp.lt.s32.totalorder %s9, 2
    // Predicated region
    $region21: #{fm_forward.3} parent=5 // pred_check
      %p141 = pneg %p140
    $region22: #{fm_forward.3} parent=5 // pred_check_branch
      %143 = sbr.rel (%p141) target = $region24
    $region23: #{fm_forward.3} parent=5 // pred_region
      // Predicated region
      $region25: #{fm_forward.3} parent=23 // pred_check
        %p144 = pneg %p43
      $region26: #{fm_forward.3} parent=23 // pred_check_branch
        %146 = sbr.rel (%p144) target = $region28
      $region27: #{fm_forward.3} parent=23 // pred_region
        %s147 = smul.u32 2, %s17
        %p148 = scmp.lt.s32.totalorder %s16, 1
        %s149 = scalar_select %p148, %s16, 1
        %p150 = scmp.lt.s32.totalorder %s147, 1
        %s151 = scalar_select %p150, %s147, 1
        %s152 = smul.addr %s149, 2
        %s153 = sadd.s32 %s151, %s152
        %s154 = smul.addr %s153, 4
        %s155 = scalar_lea.vmem %s0, %s154
        %s156 = smul.u32 2, %s17
      $region28: #{fm_forward.3} parent=23 // pred_fallthru
        _
    $region24: #{fm_forward.3} parent=5 // pred_fallthru
      _
    %p157 = scmp.le.s32.totalorder 1, %s9
    %p158 = scmp.lt.s32.totalorder %s9, 3
    %p159 = pnand %p157, %p158
    %p160 = pneg %p159
    // Predicated region
    $region29: #{fm_forward.3} parent=5 // pred_check
      _
    $region30: #{fm_forward.3} parent=5 // pred_check_branch
      %162 = sbr.rel (%p159) target = $region32
    $region31: #{fm_forward.3} parent=5 // pred_region
      %s163 = ssub.s32 %s9, 1
      %s164 = smul.u32 2, %s19
      %p165 = scmp.lt.s32.totalorder %s18, 1
      %s166 = scalar_select %p165, %s18, 1
      %p167 = scmp.lt.s32.totalorder %s164, 1
      %s168 = scalar_select %p167, %s164, 1
      %s169 = smul.addr %s166, 2
      %s170 = sadd.s32 %s168, %s169
      %s171 = smul.addr %s170, 4
      %s172 = scalar_lea.vmem %s0, %s171
      %p173 = pneg %p49
      %p174 = pneg %p46
      %p175 = pneg %p70
      %p176 = pneg %p67
      %p177 = pneg %p91
      %p178 = pneg %p88
      %p179 = pneg %p119
      %p180 = pneg %p116
      %s181 = smul.u32 2, %s19
      %p182 = scmp.lt.s32.totalorder %s18, 1
      %s183 = scalar_select %p182, %s18, 1
      %p184 = scmp.lt.s32.totalorder %s181, 1
      %s185 = scalar_select %p184, %s181, 1
      %s186 = smul.addr %s183, 2
      %s187 = sadd.s32 %s185, %s186
      %s188 = smul.addr %s187, 4
      %s189 = scalar_lea.vmem %s3, %s188
      %s190 = smul.u32 2, %s19
      %p191 = scmp.lt.s32.totalorder %s18, 1
      %s192 = scalar_select %p191, %s18, 1
      %p193 = scmp.lt.s32.totalorder %s190, 1
      %s194 = scalar_select %p193, %s190, 1
      %s195 = smul.addr %s192, 2
      %s196 = sadd.s32 %s194, %s195
      %s197 = smul.addr %s196, 4
      %s198 = scalar_lea.vmem %s0, %s197
      %s199 = smul.u32 2, %s19
      %s200 = smul.u32 2, %s19
      %p201 = scmp.lt.s32.totalorder %s18, 1
      %s202 = scalar_select %p201, %s18, 1
      %p203 = scmp.lt.s32.totalorder %s200, 1
      %s204 = scalar_select %p203, %s200, 1
      %s205 = smul.addr %s202, 2
      %s206 = sadd.s32 %s204, %s205
      %s207 = smul.addr %s206, 4
      %s208 = scalar_lea.vmem %s3, %s207
      %s209 = smul.u32 2, %s19
      %v210 = vld [vmem:[%s1] sm:$0xf]
      %v211 = vld [vmem:[%s2] sm:$0xf]
      %v212 = vld [vmem:[%s198] sm:$0xff]
      %214 = vset.pattern.permute.xlu0 0
      %215 = vperm.xlu0 %214, %v210
      %v216 = vpop.permute.xlu0 %215
      %v219 = vlaneseq
      %v220 = vshrl.u32 %v219, 7
      %v221 = vsub.s32 0, %v220
      %v222 = vrot.slane %v212, %v221
      %v223 = vlaneseq
      %v224 = vshrl.u32 %v223, 7
      %v225 = vsub.s32 4, %v224
      %v226 = vrot.slane %v212, %v225
      %v229 = vlaneseq
      %v230 = vshrl.u32 %v229, 7
      %v231 = vsub.s32 0, %v230
      %v232 = vrot.slane %v222, %v231
      %v233 = vlaneseq
      %v234 = vshrl.u32 %v233, 7
      %v235 = vsub.s32 0, %v234
      %v236 = vrot.slane %v226, %v235
      %v237 = vmul.f32 %v216, %v232
      %v238 = vmul.f32 %v216, %v236
      %239 = vset.pattern.permute.xlu0 1
      %240 = vperm.xlu0 %239, %v210
      %v241 = vpop.permute.xlu0 %240
      %v243 = vlaneseq
      %v244 = vshrl.u32 %v243, 7
      %v245 = vsub.s32 1, %v244
      %v246 = vrot.slane %v212, %v245
      %v247 = vlaneseq
      %v248 = vshrl.u32 %v247, 7
      %v249 = vsub.s32 5, %v248
      %v250 = vrot.slane %v212, %v249
      %v253 = vlaneseq
      %v254 = vshrl.u32 %v253, 7
      %v255 = vsub.s32 1, %v254
      %v256 = vrot.slane %v246, %v255
      %v257 = vlaneseq
      %v258 = vshrl.u32 %v257, 7
      %v259 = vsub.s32 1, %v258
      %v260 = vrot.slane %v250, %v259
      %v261 = vmul.f32 %v241, %v256
      %v262 = vmul.f32 %v241, %v260
      %v263 = vadd.f32 %v237, %v261
      %v264 = vadd.f32 %v238, %v262
      %265 = vset.pattern.permute.xlu0 2
      %266 = vperm.xlu0 %265, %v210
      %v267 = vpop.permute.xlu0 %266
      %v269 = vlaneseq
      %v270 = vshrl.u32 %v269, 7
      %v271 = vsub.s32 2, %v270
      %v272 = vrot.slane %v212, %v271
      %v273 = vlaneseq
      %v274 = vshrl.u32 %v273, 7
      %v275 = vsub.s32 6, %v274
      %v276 = vrot.slane %v212, %v275
      %v279 = vlaneseq
      %v280 = vshrl.u32 %v279, 7
      %v281 = vsub.s32 2, %v280
      %v282 = vrot.slane %v272, %v281
      %v283 = vlaneseq
      %v284 = vshrl.u32 %v283, 7
      %v285 = vsub.s32 2, %v284
      %v286 = vrot.slane %v276, %v285
      %v287 = vmul.f32 %v267, %v282
      %v288 = vmul.f32 %v267, %v286
      %v289 = vadd.f32 %v263, %v287
      %v290 = vadd.f32 %v264, %v288
      %291 = vset.pattern.permute.xlu0 3
      %292 = vperm.xlu0 %291, %v210
      %v293 = vpop.permute.xlu0 %292
      %v295 = vlaneseq
      %v296 = vshrl.u32 %v295, 7
      %v297 = vsub.s32 3, %v296
      %v298 = vrot.slane %v212, %v297
      %v299 = vlaneseq
      %v300 = vshrl.u32 %v299, 7
      %v301 = vsub.s32 7, %v300
      %v302 = vrot.slane %v212, %v301
      %v305 = vlaneseq
      %v306 = vshrl.u32 %v305, 7
      %v307 = vsub.s32 3, %v306
      %v308 = vrot.slane %v298, %v307
      %v309 = vlaneseq
      %v310 = vshrl.u32 %v309, 7
      %v311 = vsub.s32 3, %v310
      %v312 = vrot.slane %v302, %v311
      %v313 = vmul.f32 %v293, %v308
      %v314 = vmul.f32 %v293, %v312
      %v315 = vadd.f32 %v289, %v313
      %v316 = vadd.f32 %v290, %v314
      %318 = vset.pattern.permute.xlu0 0
      %319 = vperm.xlu0 %318, %v211
      %v320 = vpop.permute.xlu0 %319
      %v322 = vadd.f32 %v315, %v320
      %v323 = vadd.f32 %v316, %v320
      %v326 = vcombine.low %v322, %v323
      %328 = vst [vmem:[%s208] sm:$0xff] %v326
      %s329 = smul.u32 2, %s19
      %p330 = scmp.lt.s32.totalorder %s18, 1
      %s331 = scalar_select %p330, %s18, 1
      %p332 = scmp.lt.s32.totalorder %s329, 1
      %s333 = scalar_select %p332, %s329, 1
      %s334 = smul.addr %s331, 2
      %s335 = sadd.s32 %s333, %s334
      %s336 = smul.addr %s335, 4
      %s337 = scalar_lea.vmem %s3, %s336
      // Predicated region
      $region33: #{fm_forward.3} parent=31 // pred_check
        %p338 = pneg %p116
      $region34: #{fm_forward.3} parent=31 // pred_check_branch
        %340 = sbr.rel (%p338) target = $region36
      $region35: #{fm_forward.3} parent=31 // pred_region
        %s341 = smul.u32 2, %s19
      $region36: #{fm_forward.3} parent=31 // pred_fallthru
        _
    $region32: #{fm_forward.3} parent=5 // pred_fallthru
      _
    %p342 = scmp.le.s32.totalorder 2, %s9
    // Predicated region
    $region37: #{fm_forward.3} parent=5 // pred_check
      %p343 = pneg %p342
    $region38: #{fm_forward.3} parent=5 // pred_check_branch
      %345 = sbr.rel (%p343) target = $region40
    $region39: #{fm_forward.3} parent=5 // pred_region
      %s346 = ssub.s32 %s9, 2
      // Predicated region
      $region41: #{fm_forward.3} parent=39 // pred_check
        %p347 = pneg %p122
      $region42: #{fm_forward.3} parent=39 // pred_check_branch
        %349 = sbr.rel (%p347) target = $region44
      $region43: #{fm_forward.3} parent=39 // pred_region
        %s350 = smul.u32 2, %s21
        %p351 = scmp.lt.s32.totalorder %s20, 1
        %s352 = scalar_select %p351, %s20, 1
        %p353 = scmp.lt.s32.totalorder %s350, 1
        %s354 = scalar_select %p353, %s350, 1
        %s355 = smul.addr %s352, 2
        %s356 = sadd.s32 %s354, %s355
        %s357 = smul.addr %s356, 4
        %s358 = scalar_lea.vmem %s3, %s357
      $region44: #{fm_forward.3} parent=39 // pred_fallthru
        _
    $region40: #{fm_forward.3} parent=5 // pred_fallthru
      _
  $region6: #{fm_forward.3} parent=0 // loop_footer
    %s13 = sadd.s32 1, %s9
  $region7: #{fm_forward.3} parent=0 // loop_footer_branch
    %8 = sbr.rel target = $region3
  $region8: #{fm_forward.3} parent=0 // loop_exit
    _

// kernel: fm_forward.4
$region0: #{fm_forward.4}
  #allocation0 [shape = 'u32[]', space=smem, size = 0x4, offset = 0x4, fixed_abs, tag = 'smem constant byte address 0x4 - core index']
  #allocation1 [shape = 'u32[144,128]{1,0:T(1,128)}', space=vmem, size = 0x12000, scoped, tag = 'internal scratch']
  %s0 = inlined_call_operand.vmem [shape: f32[2,4,144], index: 0, kind: input, shape index: {}]
  %s1 = inlined_call_operand.vmem [shape: f32[2,4,144], index: 1, kind: input, shape index: {}]
  %s2 = inlined_call_operand.vmem [shape: f32[4,4,4], index: 2, kind: input, shape index: {}]
  %s3 = inlined_call_operand.vmem [shape: f32[4,4,1], index: 3, kind: input, shape index: {}]
  %s4 = inlined_call_operand.vmem [shape: f32[2,4,144], index: 4, kind: output, shape index: {0}]
  %s5 = inlined_call_operand.vmem [shape: f32[2,4,144], index: 5, kind: output, shape index: {1}]
  %6 = xla_tuple %s4, %s5
  %s7 = sld [smem:[#allocation0]]
  $region57: #{fm_forward.4} parent=0
    _
  %s9 = ssub.s32 1, %s7
  %s10 = scalar_select 0, %s9, %s7
  loop: start=0, step=1, limit=4
  $region2: #{fm_forward.4} parent=0 // loop_pre_header
    _
  $region3: #{fm_forward.4} parent=0 // loop_header
    %s12 = sphi 0, %s16
    %p13 = scmp.ge.s32.totalorder %s12, 4
    %s19 = sphi 0, %s31
    %s20 = sphi 0, %s27
    %s21 = sphi 0, %s19
    %s22 = sphi 0, %s20
    %s23 = sphi 0, %s21
    %s24 = sphi 0, %s22
    %s36 = sphi 0, %s38
    %s39 = sphi 0, %s36
    %s40 = sphi 0, %s39
    %s56 = sphi 0, %s40
    %s64 = sphi 0, %s66
    %s67 = sphi 0, %s64
    %s68 = sphi 0, %s67
    %s84 = sphi 0, %s68
    %s88 = sphi 0, %s88
    %s90 = sphi 0, %s88
    %s91 = sphi 0, %s90
    %s105 = sphi 0, %s91
    %s109 = sphi 0, %s109
    %s111 = sphi 0, %s109
    %s112 = sphi 0, %s111
    %s126 = sphi 0, %s112
    %s134 = sphi 0, %s136
    %s137 = sphi 0, %s134
    %s138 = sphi 0, %s137
    %s154 = sphi 0, %s138
    %s162 = sphi 0, %s164
    %s165 = sphi 0, %s162
    %s166 = sphi 0, %s165
    %s182 = sphi 0, %s166
  $region4: #{fm_forward.4} parent=0 // loop_header_branch
    %15 = sbr.rel (%p13) target = $region8
  $region5: #{fm_forward.4} parent=0 // loop_body
    %s17 = ssub.s32 %s12, 1
    %s18 = ssub.s32 %s12, 2
    %s25 = sadd.s32 1, %s20
    %p26 = scmp.ge.s32.totalorder %s25, 1
    %s27 = scalar_select %p26, 0, %s25
    %s28 = sadd.s32 1, %s19
    %s29 = scalar_select %p26, %s28, %s19
    %p30 = scmp.ge.s32.totalorder %s29, 2
    %s31 = scalar_select %p30, 0, %s29
    %s32 = ssub.s32 %s19, %s31
    %s33 = ssub.s32 %s20, %s27
    %s34 = sor.u32 %s32, %s33
    %p35 = scmp.eq.s32.totalorder %s34, 0
    %s37 = sadd.s32 %s36, 1
    %s38 = scalar_select %p35, %s36, %s37
    %p41 = pneg %p35
    %p42 = scmp.eq.s32.totalorder %s12, 1
    %p43 = por %p41, %p42
    %p44 = scmp.ne.s32.totalorder %s36, %s39
    %p45 = scmp.eq.s32.totalorder %s12, 0
    %p46 = por %p44, %p45
    %p47 = scmp.ne.s32.totalorder %s36, %s39
    %p48 = scmp.eq.s32.totalorder %s17, 1
    %p49 = por %p47, %p48
    %p50 = scmp.ne.s32.totalorder %s39, %s40
    %p51 = scmp.eq.s32.totalorder %s17, 0
    %p52 = por %p50, %p51
    %p53 = scmp.ne.s32.totalorder %s39, %s40
    %p54 = scmp.eq.s32.totalorder %s18, 1
    %p55 = por %p53, %p54
    %p57 = scmp.ne.s32.totalorder %s40, %s56
    %p58 = scmp.eq.s32.totalorder %s18, 0
    %p59 = por %p57, %p58
    %s60 = ssub.s32 %s19, %s31
    %s61 = ssub.s32 %s20, %s27
    %s62 = sor.u32 %s60, %s61
    %p63 = scmp.eq.s32.totalorder %s62, 0
    %s65 = sadd.s32 %s64, 1
    %s66 = scalar_select %p63, %s64, %s65
    %p69 = pneg %p63
    %p70 = scmp.eq.s32.totalorder %s12, 1
    %p71 = por %p69, %p70
    %p72 = scmp.ne.s32.totalorder %s64, %s67
    %p73 = scmp.eq.s32.totalorder %s12, 0
    %p74 = por %p72, %p73
    %p75 = scmp.ne.s32.totalorder %s64, %s67
    %p76 = scmp.eq.s32.totalorder %s17, 1
    %p77 = por %p75, %p76
    %p78 = scmp.ne.s32.totalorder %s67, %s68
    %p79 = scmp.eq.s32.totalorder %s17, 0
    %p80 = por %p78, %p79
    %p81 = scmp.ne.s32.totalorder %s67, %s68
    %p82 = scmp.eq.s32.totalorder %s18, 1
    %p83 = por %p81, %p82
    %p85 = scmp.ne.s32.totalorder %s68, %s84
    %p86 = scmp.eq.s32.totalorder %s18, 0
    %p87 = por %p85, %p86
    %s89 = sadd.s32 %s88, 1
    %p92 = scmp.eq.s32.totalorder %s12, 1
    %p93 = scmp.ne.s32.totalorder %s88, %s90
    %p94 = scmp.eq.s32.totalorder %s12, 0
    %p95 = por %p93, %p94
    %p96 = scmp.ne.s32.totalorder %s88, %s90
    %p97 = scmp.eq.s32.totalorder %s17, 1
    %p98 = por %p96, %p97
    %p99 = scmp.ne.s32.totalorder %s90, %s91
    %p100 = scmp.eq.s32.totalorder %s17, 0
    %p101 = por %p99, %p100
    %p102 = scmp.ne.s32.totalorder %s90, %s91
    %p103 = scmp.eq.s32.totalorder %s18, 1
    %p104 = por %p102, %p103
    %p106 = scmp.ne.s32.totalorder %s91, %s105
    %p107 = scmp.eq.s32.totalorder %s18, 0
    %p108 = por %p106, %p107
    %s110 = sadd.s32 %s109, 1
    %p113 = scmp.eq.s32.totalorder %s12, 1
    %p114 = scmp.ne.s32.totalorder %s109, %s111
    %p115 = scmp.eq.s32.totalorder %s12, 0
    %p116 = por %p114, %p115
    %p117 = scmp.ne.s32.totalorder %s109, %s111
    %p118 = scmp.eq.s32.totalorder %s17, 1
    %p119 = por %p117, %p118
    %p120 = scmp.ne.s32.totalorder %s111, %s112
    %p121 = scmp.eq.s32.totalorder %s17, 0
    %p122 = por %p120, %p121
    %p123 = scmp.ne.s32.totalorder %s111, %s112
    %p124 = scmp.eq.s32.totalorder %s18, 1
    %p125 = por %p123, %p124
    %p127 = scmp.ne.s32.totalorder %s112, %s126
    %p128 = scmp.eq.s32.totalorder %s18, 0
    %p129 = por %p127, %p128
    %s130 = ssub.s32 %s19, %s31
    %s131 = ssub.s32 %s20, %s27
    %s132 = sor.u32 %s130, %s131
    %p133 = scmp.eq.s32.totalorder %s132, 0
    %s135 = sadd.s32 %s134, 1
    %s136 = scalar_select %p133, %s134, %s135
    %p139 = pneg %p133
    %p140 = scmp.eq.s32.totalorder %s12, 1
    %p141 = por %p139, %p140
    %p142 = scmp.ne.s32.totalorder %s134, %s137
    %p143 = scmp.eq.s32.totalorder %s12, 0
    %p144 = por %p142, %p143
    %p145 = scmp.ne.s32.totalorder %s134, %s137
    %p146 = scmp.eq.s32.totalorder %s17, 1
    %p147 = por %p145, %p146
    %p148 = scmp.ne.s32.totalorder %s137, %s138
    %p149 = scmp.eq.s32.totalorder %s17, 0
    %p150 = por %p148, %p149
    %p151 = scmp.ne.s32.totalorder %s137, %s138
    %p152 = scmp.eq.s32.totalorder %s18, 1
    %p153 = por %p151, %p152
    %p155 = scmp.ne.s32.totalorder %s138, %s154
    %p156 = scmp.eq.s32.totalorder %s18, 0
    %p157 = por %p155, %p156
    %s158 = ssub.s32 %s19, %s31
    %s159 = ssub.s32 %s20, %s27
    %s160 = sor.u32 %s158, %s159
    %p161 = scmp.eq.s32.totalorder %s160, 0
    %s163 = sadd.s32 %s162, 1
    %s164 = scalar_select %p161, %s162, %s163
    %p167 = pneg %p161
    %p168 = scmp.eq.s32.totalorder %s12, 1
    %p169 = por %p167, %p168
    %p170 = scmp.ne.s32.totalorder %s162, %s165
    %p171 = scmp.eq.s32.totalorder %s12, 0
    %p172 = por %p170, %p171
    %p173 = scmp.ne.s32.totalorder %s162, %s165
    %p174 = scmp.eq.s32.totalorder %s17, 1
    %p175 = por %p173, %p174
    %p176 = scmp.ne.s32.totalorder %s165, %s166
    %p177 = scmp.eq.s32.totalorder %s17, 0
    %p178 = por %p176, %p177
    %p179 = scmp.ne.s32.totalorder %s165, %s166
    %p180 = scmp.eq.s32.totalorder %s18, 1
    %p181 = por %p179, %p180
    %p183 = scmp.ne.s32.totalorder %s166, %s182
    %p184 = scmp.eq.s32.totalorder %s18, 0
    %p185 = por %p183, %p184
    %p186 = scmp.le.s32.totalorder 1, %s12
    %p187 = scmp.lt.s32.totalorder %s12, 3
    %p188 = pnand %p186, %p187
    %p189 = pneg %p188
    // Predicated region
    $region9: #{fm_forward.4} parent=5 // pred_check
      _
    $region10: #{fm_forward.4} parent=5 // pred_check_branch
      %191 = sbr.rel (%p188) target = $region12
    $region11: #{fm_forward.4} parent=5 // pred_region
      %s192 = ssub.s32 %s12, 1
      // Predicated region
      $region13: #{fm_forward.4} parent=11 // pred_check
        %p193 = pneg %p101
      $region14: #{fm_forward.4} parent=11 // pred_check_branch
        %195 = sbr.rel (%p193) target = $region16
      $region15: #{fm_forward.4} parent=11 // pred_region
        _
      $region16: #{fm_forward.4} parent=11 // pred_fallthru
        _
      // Predicated region
      $region17: #{fm_forward.4} parent=11 // pred_check
        %p196 = pneg %p122
      $region18: #{fm_forward.4} parent=11 // pred_check_branch
        %198 = sbr.rel (%p196) target = $region20
      $region19: #{fm_forward.4} parent=11 // pred_region
        _
      $region20: #{fm_forward.4} parent=11 // pred_fallthru
        _
    $region12: #{fm_forward.4} parent=5 // pred_fallthru
      _
    %p199 = scmp.lt.s32.totalorder %s12, 2
    // Predicated region
    $region21: #{fm_forward.4} parent=5 // pred_check
      %p200 = pneg %p199
    $region22: #{fm_forward.4} parent=5 // pred_check_branch
      %202 = sbr.rel (%p200) target = $region24
    $region23: #{fm_forward.4} parent=5 // pred_region
      // Predicated region
      $region25: #{fm_forward.4} parent=23 // pred_check
        %p203 = pneg %p46
      $region26: #{fm_forward.4} parent=23 // pred_check_branch
        %205 = sbr.rel (%p203) target = $region28
      $region27: #{fm_forward.4} parent=23 // pred_region
        %s206 = smul.u32 2, %s20
        %p207 = scmp.lt.s32.totalorder %s19, 1
        %s208 = scalar_select %p207, %s19, 1
        %p209 = scmp.lt.s32.totalorder %s206, 1
        %s210 = scalar_select %p209, %s206, 1
        %s211 = smul.addr %s208, 2
        %s212 = sadd.s32 %s210, %s211
        %s213 = smul.addr %s212, 4
        %s214 = scalar_lea.vmem %s0, %s213
        %s215 = smul.u32 2, %s20
      $region28: #{fm_forward.4} parent=23 // pred_fallthru
        _
      // Predicated region
      $region29: #{fm_forward.4} parent=23 // pred_check
        %p216 = pneg %p74
      $region30: #{fm_forward.4} parent=23 // pred_check_branch
        %218 = sbr.rel (%p216) target = $region32
      $region31: #{fm_forward.4} parent=23 // pred_region
        %s219 = smul.u32 2, %s20
        %p220 = scmp.lt.s32.totalorder %s19, 1
        %s221 = scalar_select %p220, %s19, 1
        %p222 = scmp.lt.s32.totalorder %s219, 1
        %s223 = scalar_select %p222, %s219, 1
        %s224 = smul.addr %s221, 2
        %s225 = sadd.s32 %s223, %s224
        %s226 = smul.addr %s225, 4
        %s227 = scalar_lea.vmem %s1, %s226
        %s228 = smul.u32 2, %s20
      $region32: #{fm_forward.4} parent=23 // pred_fallthru
        _
    $region24: #{fm_forward.4} parent=5 // pred_fallthru
      _
    %p229 = scmp.le.s32.totalorder 1, %s12
    %p230 = scmp.lt.s32.totalorder %s12, 3
    %p231 = pnand %p229, %p230
    %p232 = pneg %p231
    // Predicated region
    $region33: #{fm_forward.4} parent=5 // pred_check
      _
    $region34: #{fm_forward.4} parent=5 // pred_check_branch
      %234 = sbr.rel (%p231) target = $region36
    $region35: #{fm_forward.4} parent=5 // pred_region
      %s235 = ssub.s32 %s12, 1
      %s236 = smul.u32 2, %s22
      %p237 = scmp.lt.s32.totalorder %s21, 1
      %s238 = scalar_select %p237, %s21, 1
      %p239 = scmp.lt.s32.totalorder %s236, 1
      %s240 = scalar_select %p239, %s236, 1
      %s241 = smul.addr %s238, 2
      %s242 = sadd.s32 %s240, %s241
      %s243 = smul.addr %s242, 4
      %s244 = scalar_lea.vmem %s0, %s243
      %p245 = pneg %p52
      %p246 = pneg %p49
      %s247 = smul.u32 2, %s22
      %p248 = scmp.lt.s32.totalorder %s21, 1
      %s249 = scalar_select %p248, %s21, 1
      %p250 = scmp.lt.s32.totalorder %s247, 1
      %s251 = scalar_select %p250, %s247, 1
      %s252 = smul.addr %s249, 2
      %s253 = sadd.s32 %s251, %s252
      %s254 = smul.addr %s253, 4
      %s255 = scalar_lea.vmem %s1, %s254
      %p256 = pneg %p80
      %p257 = pneg %p77
      %p258 = pneg %p101
      %p259 = pneg %p98
      %p260 = pneg %p122
      %p261 = pneg %p119
      %p262 = pneg %p150
      %p263 = pneg %p147
      %s264 = smul.u32 2, %s22
      %p265 = scmp.lt.s32.totalorder %s21, 1
      %s266 = scalar_select %p265, %s21, 1
      %p267 = scmp.lt.s32.totalorder %s264, 1
      %s268 = scalar_select %p267, %s264, 1
      %s269 = smul.addr %s266, 2
      %s270 = sadd.s32 %s268, %s269
      %s271 = smul.addr %s270, 4
      %s272 = scalar_lea.vmem %s4, %s271
      %p273 = pneg %p178
      %p274 = pneg %p175
      %s275 = smul.u32 2, %s22
      %p276 = scmp.lt.s32.totalorder %s21, 1
      %s277 = scalar_select %p276, %s21, 1
      %p278 = scmp.lt.s32.totalorder %s275, 1
      %s279 = scalar_select %p278, %s275, 1
      %s280 = smul.addr %s277, 2
      %s281 = sadd.s32 %s279, %s280
      %s282 = smul.addr %s281, 4
      %s283 = scalar_lea.vmem %s5, %s282
      %s284 = smul.u32 2, %s22
      %p285 = scmp.lt.s32.totalorder %s21, 1
      %s286 = scalar_select %p285, %s21, 1
      %p287 = scmp.lt.s32.totalorder %s284, 1
      %s288 = scalar_select %p287, %s284, 1
      %s289 = smul.addr %s286, 2
      %s290 = sadd.s32 %s288, %s289
      %s291 = smul.addr %s290, 4
      %s292 = scalar_lea.vmem %s0, %s291
      %s293 = smul.u32 2, %s22
      %s294 = smul.u32 2, %s22
      %p295 = scmp.lt.s32.totalorder %s21, 1
      %s296 = scalar_select %p295, %s21, 1
      %p297 = scmp.lt.s32.totalorder %s294, 1
      %s298 = scalar_select %p297, %s294, 1
      %s299 = smul.addr %s296, 2
      %s300 = sadd.s32 %s298, %s299
      %s301 = smul.addr %s300, 4
      %s302 = scalar_lea.vmem %s1, %s301
      %s303 = smul.u32 2, %s22
      %s304 = smul.u32 2, %s22
      %p305 = scmp.lt.s32.totalorder %s21, 1
      %s306 = scalar_select %p305, %s21, 1
      %p307 = scmp.lt.s32.totalorder %s304, 1
      %s308 = scalar_select %p307, %s304, 1
      %s309 = smul.addr %s306, 2
      %s310 = sadd.s32 %s308, %s309
      %s311 = smul.addr %s310, 4
      %s312 = scalar_lea.vmem %s4, %s311
      %s313 = smul.u32 2, %s22
      %s314 = smul.u32 2, %s22
      %p315 = scmp.lt.s32.totalorder %s21, 1
      %s316 = scalar_select %p315, %s21, 1
      %p317 = scmp.lt.s32.totalorder %s314, 1
      %s318 = scalar_select %p317, %s314, 1
      %s319 = smul.addr %s316, 2
      %s320 = sadd.s32 %s318, %s319
      %s321 = smul.addr %s320, 4
      %s322 = scalar_lea.vmem %s5, %s321
      %s323 = smul.u32 2, %s22
      %v324 = vld [vmem:[%s2] sm:$0xf]
      %v325 = vld [vmem:[%s3] sm:$0xf]
      %v326 = vld [vmem:[%s292] sm:$0xff]
      %328 = vset.pattern.permute.xlu0 0
      %329 = vperm.xlu0 %328, %v324
      %v330 = vpop.permute.xlu0 %329
      %v333 = vlaneseq
      %v334 = vshrl.u32 %v333, 7
      %v335 = vsub.s32 0, %v334
      %v336 = vrot.slane %v326, %v335
      %v337 = vlaneseq
      %v338 = vshrl.u32 %v337, 7
      %v339 = vsub.s32 4, %v338
      %v340 = vrot.slane %v326, %v339
      %v343 = vlaneseq
      %v344 = vshrl.u32 %v343, 7
      %v345 = vsub.s32 0, %v344
      %v346 = vrot.slane %v336, %v345
      %v347 = vlaneseq
      %v348 = vshrl.u32 %v347, 7
      %v349 = vsub.s32 0, %v348
      %v350 = vrot.slane %v340, %v349
      %v351 = vmul.f32 %v330, %v346
      %v352 = vmul.f32 %v330, %v350
      %353 = vset.pattern.permute.xlu0 1
      %354 = vperm.xlu0 %353, %v324
      %v355 = vpop.permute.xlu0 %354
      %v357 = vlaneseq
      %v358 = vshrl.u32 %v357, 7
      %v359 = vsub.s32 1, %v358
      %v360 = vrot.slane %v326, %v359
      %v361 = vlaneseq
      %v362 = vshrl.u32 %v361, 7
      %v363 = vsub.s32 5, %v362
      %v364 = vrot.slane %v326, %v363
      %v367 = vlaneseq
      %v368 = vshrl.u32 %v367, 7
      %v369 = vsub.s32 1, %v368
      %v370 = vrot.slane %v360, %v369
      %v371 = vlaneseq
      %v372 = vshrl.u32 %v371, 7
      %v373 = vsub.s32 1, %v372
      %v374 = vrot.slane %v364, %v373
      %v375 = vmul.f32 %v355, %v370
      %v376 = vmul.f32 %v355, %v374
      %v377 = vadd.f32 %v351, %v375
      %v378 = vadd.f32 %v352, %v376
      %379 = vset.pattern.permute.xlu0 2
      %380 = vperm.xlu0 %379, %v324
      %v381 = vpop.permute.xlu0 %380
      %v383 = vlaneseq
      %v384 = vshrl.u32 %v383, 7
      %v385 = vsub.s32 2, %v384
      %v386 = vrot.slane %v326, %v385
      %v387 = vlaneseq
      %v388 = vshrl.u32 %v387, 7
      %v389 = vsub.s32 6, %v388
      %v390 = vrot.slane %v326, %v389
      %v393 = vlaneseq
      %v394 = vshrl.u32 %v393, 7
      %v395 = vsub.s32 2, %v394
      %v396 = vrot.slane %v386, %v395
      %v397 = vlaneseq
      %v398 = vshrl.u32 %v397, 7
      %v399 = vsub.s32 2, %v398
      %v400 = vrot.slane %v390, %v399
      %v401 = vmul.f32 %v381, %v396
      %v402 = vmul.f32 %v381, %v400
      %v403 = vadd.f32 %v377, %v401
      %v404 = vadd.f32 %v378, %v402
      %405 = vset.pattern.permute.xlu0 3
      %406 = vperm.xlu0 %405, %v324
      %v407 = vpop.permute.xlu0 %406
      %v409 = vlaneseq
      %v410 = vshrl.u32 %v409, 7
      %v411 = vsub.s32 3, %v410
      %v412 = vrot.slane %v326, %v411
      %v413 = vlaneseq
      %v414 = vshrl.u32 %v413, 7
      %v415 = vsub.s32 7, %v414
      %v416 = vrot.slane %v326, %v415
      %v419 = vlaneseq
      %v420 = vshrl.u32 %v419, 7
      %v421 = vsub.s32 3, %v420
      %v422 = vrot.slane %v412, %v421
      %v423 = vlaneseq
      %v424 = vshrl.u32 %v423, 7
      %v425 = vsub.s32 3, %v424
      %v426 = vrot.slane %v416, %v425
      %v427 = vmul.f32 %v407, %v422
      %v428 = vmul.f32 %v407, %v426
      %v429 = vadd.f32 %v403, %v427
      %v430 = vadd.f32 %v404, %v428
      %432 = vset.pattern.permute.xlu0 0
      %433 = vperm.xlu0 %432, %v325
      %v434 = vpop.permute.xlu0 %433
      %v436 = vadd.f32 %v429, %v434
      %v437 = vadd.f32 %v430, %v434
      %vm438 = vcmp.ge.f32.partialorder %v436, 0.0
      %vm439 = vcmp.ge.f32.partialorder %v437, 0.0
      %v440 = vmul.f32 %v436, 0.1
      %v441 = vmul.f32 %v437, 0.1
      %v442 = vsel %vm438, %v436, %v440
      %v443 = vsel %vm439, %v437, %v441
      %s444 = scalar_lea.vmem %s2, 4
      %v445 = vld [vmem:[%s444] sm:$0xf]
      %s446 = scalar_lea.vmem %s3, 4
      %v447 = vld [vmem:[%s446] sm:$0xf]
      %449 = vset.pattern.permute.xlu0 0
      %450 = vperm.xlu0 %449, %v445
      %v451 = vpop.permute.xlu0 %450
      %v453 = vlaneseq
      %v454 = vshrl.u32 %v453, 7
      %v455 = vsub.s32 0, %v454
      %v456 = vrot.slane %v442, %v455
      %v457 = vlaneseq
      %v458 = vshrl.u32 %v457, 7
      %v459 = vsub.s32 0, %v458
      %v460 = vrot.slane %v443, %v459
      %v461 = vmul.f32 %v451, %v456
      %v462 = vmul.f32 %v451, %v460
      %463 = vset.pattern.permute.xlu0 1
      %464 = vperm.xlu0 %463, %v445
      %v465 = vpop.permute.xlu0 %464
      %v467 = vlaneseq
      %v468 = vshrl.u32 %v467, 7
      %v469 = vsub.s32 1, %v468
      %v470 = vrot.slane %v442, %v469
      %v471 = vlaneseq
      %v472 = vshrl.u32 %v471, 7
      %v473 = vsub.s32 1, %v472
      %v474 = vrot.slane %v443, %v473
      %v475 = vmul.f32 %v465, %v470
      %v476 = vmul.f32 %v465, %v474
      %v477 = vadd.f32 %v461, %v475
      %v478 = vadd.f32 %v462, %v476
      %479 = vset.pattern.permute.xlu0 2
      %480 = vperm.xlu0 %479, %v445
      %v481 = vpop.permute.xlu0 %480
      %v483 = vlaneseq
      %v484 = vshrl.u32 %v483, 7
      %v485 = vsub.s32 2, %v484
      %v486 = vrot.slane %v442, %v485
      %v487 = vlaneseq
      %v488 = vshrl.u32 %v487, 7
      %v489 = vsub.s32 2, %v488
      %v490 = vrot.slane %v443, %v489
      %v491 = vmul.f32 %v481, %v486
      %v492 = vmul.f32 %v481, %v490
      %v493 = vadd.f32 %v477, %v491
      %v494 = vadd.f32 %v478, %v492
      %495 = vset.pattern.permute.xlu0 3
      %496 = vperm.xlu0 %495, %v445
      %v497 = vpop.permute.xlu0 %496
      %v499 = vlaneseq
      %v500 = vshrl.u32 %v499, 7
      %v501 = vsub.s32 3, %v500
      %v502 = vrot.slane %v442, %v501
      %v503 = vlaneseq
      %v504 = vshrl.u32 %v503, 7
      %v505 = vsub.s32 3, %v504
      %v506 = vrot.slane %v443, %v505
      %v507 = vmul.f32 %v497, %v502
      %v508 = vmul.f32 %v497, %v506
      %v509 = vadd.f32 %v493, %v507
      %v510 = vadd.f32 %v494, %v508
      %512 = vset.pattern.permute.xlu0 0
      %513 = vperm.xlu0 %512, %v447
      %v514 = vpop.permute.xlu0 %513
      %v516 = vadd.f32 %v509, %v514
      %v517 = vadd.f32 %v510, %v514
      %v520 = vcombine.low %v516, %v517
      %vm522 = vcmask 1043456
      %vm523 = vcmask 130052
      %vm524 = vmor %vm523, %vm522
      %525 = vst.msk [vmem:[%s312] sm:$0xff] %vm524, %v520
      %s526 = scalar_lea.vmem %s2, 8
      %v527 = vld [vmem:[%s526] sm:$0xf]
      %s528 = scalar_lea.vmem %s3, 8
      %v529 = vld [vmem:[%s528] sm:$0xf]
      %v530 = vld [vmem:[%s302] sm:$0xff]
      %532 = vset.pattern.permute.xlu0 0
      %533 = vperm.xlu0 %532, %v527
      %v534 = vpop.permute.xlu0 %533
      %v537 = vlaneseq
      %v538 = vshrl.u32 %v537, 7
      %v539 = vsub.s32 0, %v538
      %v540 = vrot.slane %v530, %v539
      %v541 = vlaneseq
      %v542 = vshrl.u32 %v541, 7
      %v543 = vsub.s32 4, %v542
      %v544 = vrot.slane %v530, %v543
      %v547 = vlaneseq
      %v548 = vshrl.u32 %v547, 7
      %v549 = vsub.s32 0, %v548
      %v550 = vrot.slane %v540, %v549
      %v551 = vlaneseq
      %v552 = vshrl.u32 %v551, 7
      %v553 = vsub.s32 0, %v552
      %v554 = vrot.slane %v544, %v553
      %v555 = vmul.f32 %v534, %v550
      %v556 = vmul.f32 %v534, %v554
      %557 = vset.pattern.permute.xlu0 1
      %558 = vperm.xlu0 %557, %v527
      %v559 = vpop.permute.xlu0 %558
      %v561 = vlaneseq
      %v562 = vshrl.u32 %v561, 7
      %v563 = vsub.s32 1, %v562
      %v564 = vrot.slane %v530, %v563
      %v565 = vlaneseq
      %v566 = vshrl.u32 %v565, 7
      %v567 = vsub.s32 5, %v566
      %v568 = vrot.slane %v530, %v567
      %v571 = vlaneseq
      %v572 = vshrl.u32 %v571, 7
      %v573 = vsub.s32 1, %v572
      %v574 = vrot.slane %v564, %v573
      %v575 = vlaneseq
      %v576 = vshrl.u32 %v575, 7
      %v577 = vsub.s32 1, %v576
      %v578 = vrot.slane %v568, %v577
      %v579 = vmul.f32 %v559, %v574
      %v580 = vmul.f32 %v559, %v578
      %v581 = vadd.f32 %v555, %v579
      %v582 = vadd.f32 %v556, %v580
      %583 = vset.pattern.permute.xlu0 2
      %584 = vperm.xlu0 %583, %v527
      %v585 = vpop.permute.xlu0 %584
      %v587 = vlaneseq
      %v588 = vshrl.u32 %v587, 7
      %v589 = vsub.s32 2, %v588
      %v590 = vrot.slane %v530, %v589
      %v591 = vlaneseq
      %v592 = vshrl.u32 %v591, 7
      %v593 = vsub.s32 6, %v592
      %v594 = vrot.slane %v530, %v593
      %v597 = vlaneseq
      %v598 = vshrl.u32 %v597, 7
      %v599 = vsub.s32 2, %v598
      %v600 = vrot.slane %v590, %v599
      %v601 = vlaneseq
      %v602 = vshrl.u32 %v601, 7
      %v603 = vsub.s32 2, %v602
      %v604 = vrot.slane %v594, %v603
      %v605 = vmul.f32 %v585, %v600
      %v606 = vmul.f32 %v585, %v604
      %v607 = vadd.f32 %v581, %v605
      %v608 = vadd.f32 %v582, %v606
      %609 = vset.pattern.permute.xlu0 3
      %610 = vperm.xlu0 %609, %v527
      %v611 = vpop.permute.xlu0 %610
      %v613 = vlaneseq
      %v614 = vshrl.u32 %v613, 7
      %v615 = vsub.s32 3, %v614
      %v616 = vrot.slane %v530, %v615
      %v617 = vlaneseq
      %v618 = vshrl.u32 %v617, 7
      %v619 = vsub.s32 7, %v618
      %v620 = vrot.slane %v530, %v619
      %v623 = vlaneseq
      %v624 = vshrl.u32 %v623, 7
      %v625 = vsub.s32 3, %v624
      %v626 = vrot.slane %v616, %v625
      %v627 = vlaneseq
      %v628 = vshrl.u32 %v627, 7
      %v629 = vsub.s32 3, %v628
      %v630 = vrot.slane %v620, %v629
      %v631 = vmul.f32 %v611, %v626
      %v632 = vmul.f32 %v611, %v630
      %v633 = vadd.f32 %v607, %v631
      %v634 = vadd.f32 %v608, %v632
      %636 = vset.pattern.permute.xlu0 0
      %637 = vperm.xlu0 %636, %v529
      %v638 = vpop.permute.xlu0 %637
      %v640 = vadd.f32 %v633, %v638
      %v641 = vadd.f32 %v634, %v638
      %vm642 = vcmp.ge.f32.partialorder %v640, 0.0
      %vm643 = vcmp.ge.f32.partialorder %v641, 0.0
      %v644 = vmul.f32 %v640, 0.1
      %v645 = vmul.f32 %v641, 0.1
      %v646 = vsel %vm642, %v640, %v644
      %v647 = vsel %vm643, %v641, %v645
      %s648 = scalar_lea.vmem %s2, 12
      %v649 = vld [vmem:[%s648] sm:$0xf]
      %s650 = scalar_lea.vmem %s3, 12
      %v651 = vld [vmem:[%s650] sm:$0xf]
      %653 = vset.pattern.permute.xlu0 0
      %654 = vperm.xlu0 %653, %v649
      %v655 = vpop.permute.xlu0 %654
      %v657 = vlaneseq
      %v658 = vshrl.u32 %v657, 7
      %v659 = vsub.s32 0, %v658
      %v660 = vrot.slane %v646, %v659
      %v661 = vlaneseq
      %v662 = vshrl.u32 %v661, 7
      %v663 = vsub.s32 0, %v662
      %v664 = vrot.slane %v647, %v663
      %v665 = vmul.f32 %v655, %v660
      %v666 = vmul.f32 %v655, %v664
      %667 = vset.pattern.permute.xlu0 1
      %668 = vperm.xlu0 %667, %v649
      %v669 = vpop.permute.xlu0 %668
      %v671 = vlaneseq
      %v672 = vshrl.u32 %v671, 7
      %v673 = vsub.s32 1, %v672
      %v674 = vrot.slane %v646, %v673
      %v675 = vlaneseq
      %v676 = vshrl.u32 %v675, 7
      %v677 = vsub.s32 1, %v676
      %v678 = vrot.slane %v647, %v677
      %v679 = vmul.f32 %v669, %v674
      %v680 = vmul.f32 %v669, %v678
      %v681 = vadd.f32 %v665, %v679
      %v682 = vadd.f32 %v666, %v680
      %683 = vset.pattern.permute.xlu0 2
      %684 = vperm.xlu0 %683, %v649
      %v685 = vpop.permute.xlu0 %684
      %v687 = vlaneseq
      %v688 = vshrl.u32 %v687, 7
      %v689 = vsub.s32 2, %v688
      %v690 = vrot.slane %v646, %v689
      %v691 = vlaneseq
      %v692 = vshrl.u32 %v691, 7
      %v693 = vsub.s32 2, %v692
      %v694 = vrot.slane %v647, %v693
      %v695 = vmul.f32 %v685, %v690
      %v696 = vmul.f32 %v685, %v694
      %v697 = vadd.f32 %v681, %v695
      %v698 = vadd.f32 %v682, %v696
      %699 = vset.pattern.permute.xlu0 3
      %700 = vperm.xlu0 %699, %v649
      %v701 = vpop.permute.xlu0 %700
      %v703 = vlaneseq
      %v704 = vshrl.u32 %v703, 7
      %v705 = vsub.s32 3, %v704
      %v706 = vrot.slane %v646, %v705
      %v707 = vlaneseq
      %v708 = vshrl.u32 %v707, 7
      %v709 = vsub.s32 3, %v708
      %v710 = vrot.slane %v647, %v709
      %v711 = vmul.f32 %v701, %v706
      %v712 = vmul.f32 %v701, %v710
      %v713 = vadd.f32 %v697, %v711
      %v714 = vadd.f32 %v698, %v712
      %716 = vset.pattern.permute.xlu0 0
      %717 = vperm.xlu0 %716, %v651
      %v718 = vpop.permute.xlu0 %717
      %v720 = vadd.f32 %v713, %v718
      %v721 = vadd.f32 %v714, %v718
      %v724 = vcombine.low %v720, %v721
      %726 = vst.msk [vmem:[%s322] sm:$0xff] %vm524, %v724
      %s727 = smul.u32 2, %s22
      %p728 = scmp.lt.s32.totalorder %s21, 1
      %s729 = scalar_select %p728, %s21, 1
      %p730 = scmp.lt.s32.totalorder %s727, 1
      %s731 = scalar_select %p730, %s727, 1
      %s732 = smul.addr %s729, 2
      %s733 = sadd.s32 %s731, %s732
      %s734 = smul.addr %s733, 4
      %s735 = scalar_lea.vmem %s4, %s734
      %s736 = smul.u32 2, %s22
      %p737 = scmp.lt.s32.totalorder %s21, 1
      %s738 = scalar_select %p737, %s21, 1
      %p739 = scmp.lt.s32.totalorder %s736, 1
      %s740 = scalar_select %p739, %s736, 1
      %s741 = smul.addr %s738, 2
      %s742 = sadd.s32 %s740, %s741
      %s743 = smul.addr %s742, 4
      %s744 = scalar_lea.vmem %s5, %s743
      // Predicated region
      $region37: #{fm_forward.4} parent=35 // pred_check
        %p745 = pneg %p147
      $region38: #{fm_forward.4} parent=35 // pred_check_branch
        %747 = sbr.rel (%p745) target = $region40
      $region39: #{fm_forward.4} parent=35 // pred_region
        %s748 = smul.u32 2, %s22
      $region40: #{fm_forward.4} parent=35 // pred_fallthru
        _
      // Predicated region
      $region41: #{fm_forward.4} parent=35 // pred_check
        %p749 = pneg %p175
      $region42: #{fm_forward.4} parent=35 // pred_check_branch
        %751 = sbr.rel (%p749) target = $region44
      $region43: #{fm_forward.4} parent=35 // pred_region
        %s752 = smul.u32 2, %s22
      $region44: #{fm_forward.4} parent=35 // pred_fallthru
        _
    $region36: #{fm_forward.4} parent=5 // pred_fallthru
      _
    %p753 = scmp.le.s32.totalorder 2, %s12
    // Predicated region
    $region45: #{fm_forward.4} parent=5 // pred_check
      %p754 = pneg %p753
    $region46: #{fm_forward.4} parent=5 // pred_check_branch
      %756 = sbr.rel (%p754) target = $region48
    $region47: #{fm_forward.4} parent=5 // pred_region
      %s757 = ssub.s32 %s12, 2
      // Predicated region
      $region49: #{fm_forward.4} parent=47 // pred_check
        %p758 = pneg %p153
      $region50: #{fm_forward.4} parent=47 // pred_check_branch
        %760 = sbr.rel (%p758) target = $region52
      $region51: #{fm_forward.4} parent=47 // pred_region
        %s761 = smul.u32 2, %s24
        %p762 = scmp.lt.s32.totalorder %s23, 1
        %s763 = scalar_select %p762, %s23, 1
        %p764 = scmp.lt.s32.totalorder %s761, 1
        %s765 = scalar_select %p764, %s761, 1
        %s766 = smul.addr %s763, 2
        %s767 = sadd.s32 %s765, %s766
        %s768 = smul.addr %s767, 4
        %s769 = scalar_lea.vmem %s4, %s768
      $region52: #{fm_forward.4} parent=47 // pred_fallthru
        _
      // Predicated region
      $region53: #{fm_forward.4} parent=47 // pred_check
        %p770 = pneg %p181
      $region54: #{fm_forward.4} parent=47 // pred_check_branch
        %772 = sbr.rel (%p770) target = $region56
      $region55: #{fm_forward.4} parent=47 // pred_region
        %s773 = smul.u32 2, %s24
        %p774 = scmp.lt.s32.totalorder %s23, 1
        %s775 = scalar_select %p774, %s23, 1
        %p776 = scmp.lt.s32.totalorder %s773, 1
        %s777 = scalar_select %p776, %s773, 1
        %s778 = smul.addr %s775, 2
        %s779 = sadd.s32 %s777, %s778
        %s780 = smul.addr %s779, 4
        %s781 = scalar_lea.vmem %s5, %s780
      $region56: #{fm_forward.4} parent=47 // pred_fallthru
        _
    $region48: #{fm_forward.4} parent=5 // pred_fallthru
      _
  $region6: #{fm_forward.4} parent=0 // loop_footer
    %s16 = sadd.s32 1, %s12
  $region7: #{fm_forward.4} parent=0 // loop_footer_branch
    %11 = sbr.rel target = $region3
  $region8: #{fm_forward.4} parent=0 // loop_exit
    _

// kernel: reverse.0
$region0: #{reverse.0}
  %s0 = inlined_call_operand.vmem [shape: f32[2,4,16,7], index: 0, kind: input, shape index: {}]
  %s1 = inlined_call_operand.vmem [shape: f32[2,4,16,7], index: 1, kind: output, shape index: {}]
  $region1: #{reverse.0} parent=0
    #allocation0 [shape = 'u8[65536]{0}', space=vmem, size = 0x10000, scoped, tag = 'operand span for operand 0']
    #allocation1 [shape = 'u8[32768]{0}', space=vmem, size = 0x8000, scoped, tag = 'operand span for operand 1']
    %s2 = scalar_lea.vmem [#allocation0], 8
    // Predicated region
    $region2: #{reverse.0} parent=1 // pred_check
      _
    $region3: #{reverse.0} parent=1 // pred_check_branch
      %4 = sbr.rel (0) target = $region5
    $region4: #{reverse.0} parent=1 // pred_region
      // Predicated region
      $region6: #{reverse.0} parent=4 // pred_check
        _
      $region7: #{reverse.0} parent=4 // pred_check_branch
        %6 = sbr.rel (0) target = $region9
      $region8: #{reverse.0} parent=4 // pred_region
        // Predicated region
        $region21: #{reverse.0} parent=8 // pred_check
          _
        $region22: #{reverse.0} parent=8 // pred_check_branch
          %35 = sbr.rel (0) target = $region24
        $region23: #{reverse.0} parent=8 // pred_region
          loop: start=0, step=1, limit=1
          $region25: #{reverse.0} parent=23 // loop_pre_header
            _
          $region26: #{reverse.0} parent=23 // loop_header
            %s37 = sphi 0, %s41
            %p38 = scmp.ge.s32.totalorder %s37, 1
            %s42 = sphi %s0, %s0
            %s43 = sphi %s2, %s2
          $region27: #{reverse.0} parent=23 // loop_header_branch
            %40 = sbr.rel (%p38) target = $region31
          $region28: #{reverse.0} parent=23 // loop_body
            %v44 = vld [vmem:[%s42] sm:$0xff]
            %45 = vst [vmem:[%s43] sm:$0xff] %v44
            %v46 = vld [vmem:[%s42 + $0x8] sm:$0xff]
            %47 = vst [vmem:[%s43 + $0x10] sm:$0xff] %v46
            %v48 = vld [vmem:[%s42 + $0x10] sm:$0xff]
            %49 = vst [vmem:[%s43 + $0x20] sm:$0xff] %v48
            %v50 = vld [vmem:[%s42 + $0x18] sm:$0xff]
            %51 = vst [vmem:[%s43 + $0x30] sm:$0xff] %v50
            %v52 = vld [vmem:[%s42 + $0x20] sm:$0xff]
            %53 = vst [vmem:[%s43 + $0x40] sm:$0xff] %v52
            %v54 = vld [vmem:[%s42 + $0x28] sm:$0xff]
            %55 = vst [vmem:[%s43 + $0x50] sm:$0xff] %v54
            %v56 = vld [vmem:[%s42 + $0x30] sm:$0xff]
            %57 = vst [vmem:[%s43 + $0x60] sm:$0xff] %v56
            %v58 = vld [vmem:[%s42 + $0x38] sm:$0xff]
            %59 = vst [vmem:[%s43 + $0x70] sm:$0xff] %v58
          $region29: #{reverse.0} parent=23 // loop_footer
            %s41 = sadd.s32 1, %s37
          $region30: #{reverse.0} parent=23 // loop_footer_branch
            %36 = sbr.rel target = $region26
          $region31: #{reverse.0} parent=23 // loop_exit
            _
        $region24: #{reverse.0} parent=8 // pred_fallthru
          _
        // Predicated region
        $region32: #{reverse.0} parent=8 // pred_check
          _
        $region33: #{reverse.0} parent=8 // pred_check_branch
          %61 = sbr.rel target = $region35
        $region34: #{reverse.0} parent=8 // pred_region
          _
        $region35: #{reverse.0} parent=8 // pred_fallthru
          _
      $region9: #{reverse.0} parent=4 // pred_fallthru
        _
      // Predicated region
      $region10: #{reverse.0} parent=4 // pred_check
        _
      $region11: #{reverse.0} parent=4 // pred_check_branch
        %8 = sbr.rel target = $region13
      $region12: #{reverse.0} parent=4 // pred_region
        loop: start=0, step=1, limit=1
        $region14: #{reverse.0} parent=12 // loop_pre_header
          _
        $region15: #{reverse.0} parent=12 // loop_header
          %s11 = sphi 0, %s15
          %p12 = scmp.ge.s32.totalorder %s11, 1
          %s16 = sphi %s0, %s0
          %s17 = sphi %s2, %s2
        $region16: #{reverse.0} parent=12 // loop_header_branch
          %14 = sbr.rel (%p12) target = $region20
        $region17: #{reverse.0} parent=12 // loop_body
          %v18 = vld [vmem:[%s16] sm:$0xff]
          %19 = vst [vmem:[%s17] sm:$0xff] %v18
          %v20 = vld [vmem:[%s16 + $0x8] sm:$0xff]
          %21 = vst [vmem:[%s17 + $0x10] sm:$0xff] %v20
          %v22 = vld [vmem:[%s16 + $0x10] sm:$0xff]
          %23 = vst [vmem:[%s17 + $0x20] sm:$0xff] %v22
          %v24 = vld [vmem:[%s16 + $0x18] sm:$0xff]
          %25 = vst [vmem:[%s17 + $0x30] sm:$0xff] %v24
          %v26 = vld [vmem:[%s16 + $0x20] sm:$0xff]
          %27 = vst [vmem:[%s17 + $0x40] sm:$0xff] %v26
          %v28 = vld [vmem:[%s16 + $0x28] sm:$0xff]
          %29 = vst [vmem:[%s17 + $0x50] sm:$0xff] %v28
          %v30 = vld [vmem:[%s16 + $0x30] sm:$0xff]
          %31 = vst [vmem:[%s17 + $0x60] sm:$0xff] %v30
          %v32 = vld [vmem:[%s16 + $0x38] sm:$0xff]
          %33 = vst [vmem:[%s17 + $0x70] sm:$0xff] %v32
        $region18: #{reverse.0} parent=12 // loop_footer
          %s15 = sadd.s32 1, %s11
        $region19: #{reverse.0} parent=12 // loop_footer_branch
          %10 = sbr.rel target = $region15
        $region20: #{reverse.0} parent=12 // loop_exit
          _
      $region13: #{reverse.0} parent=4 // pred_fallthru
        _
    $region5: #{reverse.0} parent=1 // pred_fallthru
      _
    %62 = vnop
    %s63 = scalar_lea.vmem [#allocation0], 7
    %v64 = vld [vmem:[%s63] ss:$-1 sm:$0xff]
    %v65 = vrot.slane %v64, 1
    %66 = vst [vmem:[#allocation1] sm:$0xff] %v65
    %s67 = scalar_lea.vmem [#allocation0], 8
    %s68 = scalar_lea.vmem %s67, 7 [#allocation0]
    %v69 = vld [vmem:[%s68] ss:$-1 sm:$0xff]
    %v70 = vrot.slane %v69, 1
    %v71 = vlaneseq
    %v72 = vshrl.u32 %v71, 7
    %vm73 = vcmp.lt.s32.totalorder %v72, 7
    %74 = vst.msk [vmem:[#allocation1] sm:$0xff] %vm73, %v70
    %s75 = scalar_lea.vmem [#allocation1], 8
    %s76 = scalar_lea.vmem [#allocation0], 16
    %s77 = scalar_lea.vmem %s76, 7 [#allocation0]
    %v78 = vld [vmem:[%s77] ss:$-1 sm:$0xff]
    %v79 = vrot.slane %v78, 1
    %80 = vst [vmem:[%s75] sm:$0xff] %v79
    %s81 = scalar_lea.vmem %s76, 8 [#allocation0]
    %s82 = scalar_lea.vmem %s81, 7 [#allocation0]
    %v83 = vld [vmem:[%s82] ss:$-1 sm:$0xff]
    %v84 = vrot.slane %v83, 1
    %v85 = vlaneseq
    %v86 = vshrl.u32 %v85, 7
    %vm87 = vcmp.lt.s32.totalorder %v86, 7
    %88 = vst.msk [vmem:[%s75] sm:$0xff] %vm87, %v84
    %s89 = scalar_lea.vmem [#allocation1], 16
    %s90 = scalar_lea.vmem [#allocation0], 32
    %s91 = scalar_lea.vmem %s90, 7 [#allocation0]
    %v92 = vld [vmem:[%s91] ss:$-1 sm:$0xff]
    %v93 = vrot.slane %v92, 1
    %94 = vst [vmem:[%s89] sm:$0xff] %v93
    %s95 = scalar_lea.vmem %s90, 8 [#allocation0]
    %s96 = scalar_lea.vmem %s95, 7 [#allocation0]
    %v97 = vld [vmem:[%s96] ss:$-1 sm:$0xff]
    %v98 = vrot.slane %v97, 1
    %v99 = vlaneseq
    %v100 = vshrl.u32 %v99, 7
    %vm101 = vcmp.lt.s32.totalorder %v100, 7
    %102 = vst.msk [vmem:[%s89] sm:$0xff] %vm101, %v98
    %s103 = scalar_lea.vmem [#allocation1], 24
    %s104 = scalar_lea.vmem [#allocation0], 48
    %s105 = scalar_lea.vmem %s104, 7 [#allocation0]
    %v106 = vld [vmem:[%s105] ss:$-1 sm:$0xff]
    %v107 = vrot.slane %v106, 1
    %108 = vst [vmem:[%s103] sm:$0xff] %v107
    %s109 = scalar_lea.vmem %s104, 8 [#allocation0]
    %s110 = scalar_lea.vmem %s109, 7 [#allocation0]
    %v111 = vld [vmem:[%s110] ss:$-1 sm:$0xff]
    %v112 = vrot.slane %v111, 1
    %v113 = vlaneseq
    %v114 = vshrl.u32 %v113, 7
    %vm115 = vcmp.lt.s32.totalorder %v114, 7
    %116 = vst.msk [vmem:[%s103] sm:$0xff] %vm115, %v112
    %s117 = scalar_lea.vmem [#allocation1], 32
    %s118 = scalar_lea.vmem [#allocation0], 64
    %s119 = scalar_lea.vmem %s118, 7 [#allocation0]
    %v120 = vld [vmem:[%s119] ss:$-1 sm:$0xff]
    %v121 = vrot.slane %v120, 1
    %122 = vst [vmem:[%s117] sm:$0xff] %v121
    %s123 = scalar_lea.vmem %s118, 8 [#allocation0]
    %s124 = scalar_lea.vmem %s123, 7 [#allocation0]
    %v125 = vld [vmem:[%s124] ss:$-1 sm:$0xff]
    %v126 = vrot.slane %v125, 1
    %v127 = vlaneseq
    %v128 = vshrl.u32 %v127, 7
    %vm129 = vcmp.lt.s32.totalorder %v128, 7
    %130 = vst.msk [vmem:[%s117] sm:$0xff] %vm129, %v126
    %s131 = scalar_lea.vmem [#allocation1], 40
    %s132 = scalar_lea.vmem [#allocation0], 80
    %s133 = scalar_lea.vmem %s132, 7 [#allocation0]
    %v134 = vld [vmem:[%s133] ss:$-1 sm:$0xff]
    %v135 = vrot.slane %v134, 1
    %136 = vst [vmem:[%s131] sm:$0xff] %v135
    %s137 = scalar_lea.vmem %s132, 8 [#allocation0]
    %s138 = scalar_lea.vmem %s137, 7 [#allocation0]
    %v139 = vld [vmem:[%s138] ss:$-1 sm:$0xff]
    %v140 = vrot.slane %v139, 1
    %v141 = vlaneseq
    %v142 = vshrl.u32 %v141, 7
    %vm143 = vcmp.lt.s32.totalorder %v142, 7
    %144 = vst.msk [vmem:[%s131] sm:$0xff] %vm143, %v140
    %s145 = scalar_lea.vmem [#allocation1], 48
    %s146 = scalar_lea.vmem [#allocation0], 96
    %s147 = scalar_lea.vmem %s146, 7 [#allocation0]
    %v148 = vld [vmem:[%s147] ss:$-1 sm:$0xff]
    %v149 = vrot.slane %v148, 1
    %150 = vst [vmem:[%s145] sm:$0xff] %v149
    %s151 = scalar_lea.vmem %s146, 8 [#allocation0]
    %s152 = scalar_lea.vmem %s151, 7 [#allocation0]
    %v153 = vld [vmem:[%s152] ss:$-1 sm:$0xff]
    %v154 = vrot.slane %v153, 1
    %v155 = vlaneseq
    %v156 = vshrl.u32 %v155, 7
    %vm157 = vcmp.lt.s32.totalorder %v156, 7
    %158 = vst.msk [vmem:[%s145] sm:$0xff] %vm157, %v154
    %s159 = scalar_lea.vmem [#allocation1], 56
    %s160 = scalar_lea.vmem [#allocation0], 112
    %s161 = scalar_lea.vmem %s160, 7 [#allocation0]
    %v162 = vld [vmem:[%s161] ss:$-1 sm:$0xff]
    %v163 = vrot.slane %v162, 1
    %164 = vst [vmem:[%s159] sm:$0xff] %v163
    %s165 = scalar_lea.vmem %s160, 8 [#allocation0]
    %s166 = scalar_lea.vmem %s165, 7 [#allocation0]
    %v167 = vld [vmem:[%s166] ss:$-1 sm:$0xff]
    %v168 = vrot.slane %v167, 1
    %v169 = vlaneseq
    %v170 = vshrl.u32 %v169, 7
    %vm171 = vcmp.lt.s32.totalorder %v170, 7
    %172 = vst.msk [vmem:[%s159] sm:$0xff] %vm171, %v168
    // Predicated region
    $region36: #{reverse.0} parent=1 // pred_check
      _
    $region37: #{reverse.0} parent=1 // pred_check_branch
      %174 = sbr.rel (0) target = $region39
    $region38: #{reverse.0} parent=1 // pred_region
      // Predicated region
      $region40: #{reverse.0} parent=38 // pred_check
        _
      $region41: #{reverse.0} parent=38 // pred_check_branch
        %176 = sbr.rel (0) target = $region43
      $region42: #{reverse.0} parent=38 // pred_region
        // Predicated region
        $region55: #{reverse.0} parent=42 // pred_check
          _
        $region56: #{reverse.0} parent=42 // pred_check_branch
          %205 = sbr.rel (0) target = $region58
        $region57: #{reverse.0} parent=42 // pred_region
          loop: start=0, step=1, limit=1
          $region59: #{reverse.0} parent=57 // loop_pre_header
            _
          $region60: #{reverse.0} parent=57 // loop_header
            %s207 = sphi 0, %s211
            %p208 = scmp.ge.s32.totalorder %s207, 1
            %s212 = sphi [#allocation1], [#allocation1]
            %s213 = sphi %s1, %s1
          $region61: #{reverse.0} parent=57 // loop_header_branch
            %210 = sbr.rel (%p208) target = $region65
          $region62: #{reverse.0} parent=57 // loop_body
            %v214 = vld [vmem:[%s212] sm:$0xff]
            %215 = vst [vmem:[%s213] sm:$0xff] %v214
            %v216 = vld [vmem:[%s212 + $0x8] sm:$0xff]
            %217 = vst [vmem:[%s213 + $0x8] sm:$0xff] %v216
            %v218 = vld [vmem:[%s212 + $0x10] sm:$0xff]
            %219 = vst [vmem:[%s213 + $0x10] sm:$0xff] %v218
            %v220 = vld [vmem:[%s212 + $0x18] sm:$0xff]
            %221 = vst [vmem:[%s213 + $0x18] sm:$0xff] %v220
            %v222 = vld [vmem:[%s212 + $0x20] sm:$0xff]
            %223 = vst [vmem:[%s213 + $0x20] sm:$0xff] %v222
            %v224 = vld [vmem:[%s212 + $0x28] sm:$0xff]
            %225 = vst [vmem:[%s213 + $0x28] sm:$0xff] %v224
            %v226 = vld [vmem:[%s212 + $0x30] sm:$0xff]
            %227 = vst [vmem:[%s213 + $0x30] sm:$0xff] %v226
            %v228 = vld [vmem:[%s212 + $0x38] sm:$0xff]
            %229 = vst [vmem:[%s213 + $0x38] sm:$0xff] %v228
          $region63: #{reverse.0} parent=57 // loop_footer
            %s211 = sadd.s32 1, %s207
          $region64: #{reverse.0} parent=57 // loop_footer_branch
            %206 = sbr.rel target = $region60
          $region65: #{reverse.0} parent=57 // loop_exit
            _
        $region58: #{reverse.0} parent=42 // pred_fallthru
          _
        // Predicated region
        $region66: #{reverse.0} parent=42 // pred_check
          _
        $region67: #{reverse.0} parent=42 // pred_check_branch
          %231 = sbr.rel target = $region69
        $region68: #{reverse.0} parent=42 // pred_region
          _
        $region69: #{reverse.0} parent=42 // pred_fallthru
          _
      $region43: #{reverse.0} parent=38 // pred_fallthru
        _
      // Predicated region
      $region44: #{reverse.0} parent=38 // pred_check
        _
      $region45: #{reverse.0} parent=38 // pred_check_branch
        %178 = sbr.rel target = $region47
      $region46: #{reverse.0} parent=38 // pred_region
        loop: start=0, step=1, limit=1
        $region48: #{reverse.0} parent=46 // loop_pre_header
          _
        $region49: #{reverse.0} parent=46 // loop_header
          %s181 = sphi 0, %s185
          %p182 = scmp.ge.s32.totalorder %s181, 1
          %s186 = sphi [#allocation1], [#allocation1]
          %s187 = sphi %s1, %s1
        $region50: #{reverse.0} parent=46 // loop_header_branch
          %184 = sbr.rel (%p182) target = $region54
        $region51: #{reverse.0} parent=46 // loop_body
          %v188 = vld [vmem:[%s186] sm:$0xff]
          %189 = vst [vmem:[%s187] sm:$0xff] %v188
          %v190 = vld [vmem:[%s186 + $0x8] sm:$0xff]
          %191 = vst [vmem:[%s187 + $0x8] sm:$0xff] %v190
          %v192 = vld [vmem:[%s186 + $0x10] sm:$0xff]
          %193 = vst [vmem:[%s187 + $0x10] sm:$0xff] %v192
          %v194 = vld [vmem:[%s186 + $0x18] sm:$0xff]
          %195 = vst [vmem:[%s187 + $0x18] sm:$0xff] %v194
          %v196 = vld [vmem:[%s186 + $0x20] sm:$0xff]
          %197 = vst [vmem:[%s187 + $0x20] sm:$0xff] %v196
          %v198 = vld [vmem:[%s186 + $0x28] sm:$0xff]
          %199 = vst [vmem:[%s187 + $0x28] sm:$0xff] %v198
          %v200 = vld [vmem:[%s186 + $0x30] sm:$0xff]
          %201 = vst [vmem:[%s187 + $0x30] sm:$0xff] %v200
          %v202 = vld [vmem:[%s186 + $0x38] sm:$0xff]
          %203 = vst [vmem:[%s187 + $0x38] sm:$0xff] %v202
        $region52: #{reverse.0} parent=46 // loop_footer
          %s185 = sadd.s32 1, %s181
        $region53: #{reverse.0} parent=46 // loop_footer_branch
          %180 = sbr.rel target = $region49
        $region54: #{reverse.0} parent=46 // loop_exit
          _
      $region47: #{reverse.0} parent=38 // pred_fallthru
        _
    $region39: #{reverse.0} parent=1 // pred_fallthru
      _
    %232 = vnop

// kernel: fm_forward.5
$region0: #{fm_forward.5}
  #allocation0 [shape = 'u32[]', space=smem, size = 0x4, offset = 0x4, fixed_abs, tag = 'smem constant byte address 0x4 - core index']
  #allocation1 [shape = 'u32[144,128]{1,0:T(1,128)}', space=vmem, size = 0x12000, scoped, tag = 'internal scratch']
  %s0 = inlined_call_operand.vmem [shape: f32[2,4,256], index: 0, kind: input, shape index: {}]
  %s1 = inlined_call_operand.vmem [shape: f32[2,4,256], index: 1, kind: input, shape index: {}]
  %s2 = inlined_call_operand.vmem [shape: f32[4,4], index: 2, kind: input, shape index: {}]
  %s3 = inlined_call_operand.vmem [shape: f32[4,1], index: 3, kind: input, shape index: {}]
  %s4 = inlined_call_operand.vmem [shape: f32[2,4,256], index: 4, kind: output, shape index: {}]
  %s5 = sld [smem:[#allocation0]]
  $region49: #{fm_forward.5} parent=0
    _
  %s7 = ssub.s32 1, %s5
  %s8 = scalar_select 0, %s7, %s5
  loop: start=0, step=1, limit=4
  $region2: #{fm_forward.5} parent=0 // loop_pre_header
    _
  $region3: #{fm_forward.5} parent=0 // loop_header
    %s10 = sphi 0, %s14
    %p11 = scmp.ge.s32.totalorder %s10, 4
    %s17 = sphi 0, %s29
    %s18 = sphi 0, %s25
    %s19 = sphi 0, %s17
    %s20 = sphi 0, %s18
    %s21 = sphi 0, %s19
    %s22 = sphi 0, %s20
    %s34 = sphi 0, %s36
    %s37 = sphi 0, %s34
    %s38 = sphi 0, %s37
    %s54 = sphi 0, %s38
    %s62 = sphi 0, %s64
    %s65 = sphi 0, %s62
    %s66 = sphi 0, %s65
    %s82 = sphi 0, %s66
    %s86 = sphi 0, %s86
    %s88 = sphi 0, %s86
    %s89 = sphi 0, %s88
    %s103 = sphi 0, %s89
    %s107 = sphi 0, %s107
    %s109 = sphi 0, %s107
    %s110 = sphi 0, %s109
    %s124 = sphi 0, %s110
    %s132 = sphi 0, %s134
    %s135 = sphi 0, %s132
    %s136 = sphi 0, %s135
    %s152 = sphi 0, %s136
  $region4: #{fm_forward.5} parent=0 // loop_header_branch
    %13 = sbr.rel (%p11) target = $region8
  $region5: #{fm_forward.5} parent=0 // loop_body
    %s15 = ssub.s32 %s10, 1
    %s16 = ssub.s32 %s10, 2
    %s23 = sadd.s32 1, %s18
    %p24 = scmp.ge.s32.totalorder %s23, 1
    %s25 = scalar_select %p24, 0, %s23
    %s26 = sadd.s32 1, %s17
    %s27 = scalar_select %p24, %s26, %s17
    %p28 = scmp.ge.s32.totalorder %s27, 2
    %s29 = scalar_select %p28, 0, %s27
    %s30 = ssub.s32 %s17, %s29
    %s31 = ssub.s32 %s18, %s25
    %s32 = sor.u32 %s30, %s31
    %p33 = scmp.eq.s32.totalorder %s32, 0
    %s35 = sadd.s32 %s34, 1
    %s36 = scalar_select %p33, %s34, %s35
    %p39 = pneg %p33
    %p40 = scmp.eq.s32.totalorder %s10, 1
    %p41 = por %p39, %p40
    %p42 = scmp.ne.s32.totalorder %s34, %s37
    %p43 = scmp.eq.s32.totalorder %s10, 0
    %p44 = por %p42, %p43
    %p45 = scmp.ne.s32.totalorder %s34, %s37
    %p46 = scmp.eq.s32.totalorder %s15, 1
    %p47 = por %p45, %p46
    %p48 = scmp.ne.s32.totalorder %s37, %s38
    %p49 = scmp.eq.s32.totalorder %s15, 0
    %p50 = por %p48, %p49
    %p51 = scmp.ne.s32.totalorder %s37, %s38
    %p52 = scmp.eq.s32.totalorder %s16, 1
    %p53 = por %p51, %p52
    %p55 = scmp.ne.s32.totalorder %s38, %s54
    %p56 = scmp.eq.s32.totalorder %s16, 0
    %p57 = por %p55, %p56
    %s58 = ssub.s32 %s17, %s29
    %s59 = ssub.s32 %s18, %s25
    %s60 = sor.u32 %s58, %s59
    %p61 = scmp.eq.s32.totalorder %s60, 0
    %s63 = sadd.s32 %s62, 1
    %s64 = scalar_select %p61, %s62, %s63
    %p67 = pneg %p61
    %p68 = scmp.eq.s32.totalorder %s10, 1
    %p69 = por %p67, %p68
    %p70 = scmp.ne.s32.totalorder %s62, %s65
    %p71 = scmp.eq.s32.totalorder %s10, 0
    %p72 = por %p70, %p71
    %p73 = scmp.ne.s32.totalorder %s62, %s65
    %p74 = scmp.eq.s32.totalorder %s15, 1
    %p75 = por %p73, %p74
    %p76 = scmp.ne.s32.totalorder %s65, %s66
    %p77 = scmp.eq.s32.totalorder %s15, 0
    %p78 = por %p76, %p77
    %p79 = scmp.ne.s32.totalorder %s65, %s66
    %p80 = scmp.eq.s32.totalorder %s16, 1
    %p81 = por %p79, %p80
    %p83 = scmp.ne.s32.totalorder %s66, %s82
    %p84 = scmp.eq.s32.totalorder %s16, 0
    %p85 = por %p83, %p84
    %s87 = sadd.s32 %s86, 1
    %p90 = scmp.eq.s32.totalorder %s10, 1
    %p91 = scmp.ne.s32.totalorder %s86, %s88
    %p92 = scmp.eq.s32.totalorder %s10, 0
    %p93 = por %p91, %p92
    %p94 = scmp.ne.s32.totalorder %s86, %s88
    %p95 = scmp.eq.s32.totalorder %s15, 1
    %p96 = por %p94, %p95
    %p97 = scmp.ne.s32.totalorder %s88, %s89
    %p98 = scmp.eq.s32.totalorder %s15, 0
    %p99 = por %p97, %p98
    %p100 = scmp.ne.s32.totalorder %s88, %s89
    %p101 = scmp.eq.s32.totalorder %s16, 1
    %p102 = por %p100, %p101
    %p104 = scmp.ne.s32.totalorder %s89, %s103
    %p105 = scmp.eq.s32.totalorder %s16, 0
    %p106 = por %p104, %p105
    %s108 = sadd.s32 %s107, 1
    %p111 = scmp.eq.s32.totalorder %s10, 1
    %p112 = scmp.ne.s32.totalorder %s107, %s109
    %p113 = scmp.eq.s32.totalorder %s10, 0
    %p114 = por %p112, %p113
    %p115 = scmp.ne.s32.totalorder %s107, %s109
    %p116 = scmp.eq.s32.totalorder %s15, 1
    %p117 = por %p115, %p116
    %p118 = scmp.ne.s32.totalorder %s109, %s110
    %p119 = scmp.eq.s32.totalorder %s15, 0
    %p120 = por %p118, %p119
    %p121 = scmp.ne.s32.totalorder %s109, %s110
    %p122 = scmp.eq.s32.totalorder %s16, 1
    %p123 = por %p121, %p122
    %p125 = scmp.ne.s32.totalorder %s110, %s124
    %p126 = scmp.eq.s32.totalorder %s16, 0
    %p127 = por %p125, %p126
    %s128 = ssub.s32 %s17, %s29
    %s129 = ssub.s32 %s18, %s25
    %s130 = sor.u32 %s128, %s129
    %p131 = scmp.eq.s32.totalorder %s130, 0
    %s133 = sadd.s32 %s132, 1
    %s134 = scalar_select %p131, %s132, %s133
    %p137 = pneg %p131
    %p138 = scmp.eq.s32.totalorder %s10, 1
    %p139 = por %p137, %p138
    %p140 = scmp.ne.s32.totalorder %s132, %s135
    %p141 = scmp.eq.s32.totalorder %s10, 0
    %p142 = por %p140, %p141
    %p143 = scmp.ne.s32.totalorder %s132, %s135
    %p144 = scmp.eq.s32.totalorder %s15, 1
    %p145 = por %p143, %p144
    %p146 = scmp.ne.s32.totalorder %s135, %s136
    %p147 = scmp.eq.s32.totalorder %s15, 0
    %p148 = por %p146, %p147
    %p149 = scmp.ne.s32.totalorder %s135, %s136
    %p150 = scmp.eq.s32.totalorder %s16, 1
    %p151 = por %p149, %p150
    %p153 = scmp.ne.s32.totalorder %s136, %s152
    %p154 = scmp.eq.s32.totalorder %s16, 0
    %p155 = por %p153, %p154
    %p156 = scmp.le.s32.totalorder 1, %s10
    %p157 = scmp.lt.s32.totalorder %s10, 3
    %p158 = pnand %p156, %p157
    %p159 = pneg %p158
    // Predicated region
    $region9: #{fm_forward.5} parent=5 // pred_check
      _
    $region10: #{fm_forward.5} parent=5 // pred_check_branch
      %161 = sbr.rel (%p158) target = $region12
    $region11: #{fm_forward.5} parent=5 // pred_region
      %s162 = ssub.s32 %s10, 1
      // Predicated region
      $region13: #{fm_forward.5} parent=11 // pred_check
        %p163 = pneg %p99
      $region14: #{fm_forward.5} parent=11 // pred_check_branch
        %165 = sbr.rel (%p163) target = $region16
      $region15: #{fm_forward.5} parent=11 // pred_region
        _
      $region16: #{fm_forward.5} parent=11 // pred_fallthru
        _
      // Predicated region
      $region17: #{fm_forward.5} parent=11 // pred_check
        %p166 = pneg %p120
      $region18: #{fm_forward.5} parent=11 // pred_check_branch
        %168 = sbr.rel (%p166) target = $region20
      $region19: #{fm_forward.5} parent=11 // pred_region
        _
      $region20: #{fm_forward.5} parent=11 // pred_fallthru
        _
    $region12: #{fm_forward.5} parent=5 // pred_fallthru
      _
    %p169 = scmp.lt.s32.totalorder %s10, 2
    // Predicated region
    $region21: #{fm_forward.5} parent=5 // pred_check
      %p170 = pneg %p169
    $region22: #{fm_forward.5} parent=5 // pred_check_branch
      %172 = sbr.rel (%p170) target = $region24
    $region23: #{fm_forward.5} parent=5 // pred_region
      // Predicated region
      $region25: #{fm_forward.5} parent=23 // pred_check
        %p173 = pneg %p44
      $region26: #{fm_forward.5} parent=23 // pred_check_branch
        %175 = sbr.rel (%p173) target = $region28
      $region27: #{fm_forward.5} parent=23 // pred_region
        %s176 = smul.u32 2, %s18
        %p177 = scmp.lt.s32.totalorder %s17, 1
        %s178 = scalar_select %p177, %s17, 1
        %p179 = scmp.lt.s32.totalorder %s176, 1
        %s180 = scalar_select %p179, %s176, 1
        %s181 = smul.addr %s178, 2
        %s182 = sadd.s32 %s180, %s181
        %s183 = smul.addr %s182, 4
        %s184 = scalar_lea.vmem %s0, %s183
        %s185 = smul.u32 2, %s18
      $region28: #{fm_forward.5} parent=23 // pred_fallthru
        _
      // Predicated region
      $region29: #{fm_forward.5} parent=23 // pred_check
        %p186 = pneg %p72
      $region30: #{fm_forward.5} parent=23 // pred_check_branch
        %188 = sbr.rel (%p186) target = $region32
      $region31: #{fm_forward.5} parent=23 // pred_region
        %s189 = smul.u32 2, %s18
        %p190 = scmp.lt.s32.totalorder %s17, 1
        %s191 = scalar_select %p190, %s17, 1
        %p192 = scmp.lt.s32.totalorder %s189, 1
        %s193 = scalar_select %p192, %s189, 1
        %s194 = smul.addr %s191, 2
        %s195 = sadd.s32 %s193, %s194
        %s196 = smul.addr %s195, 4
        %s197 = scalar_lea.vmem %s1, %s196
        %s198 = smul.u32 2, %s18
      $region32: #{fm_forward.5} parent=23 // pred_fallthru
        _
    $region24: #{fm_forward.5} parent=5 // pred_fallthru
      _
    %p199 = scmp.le.s32.totalorder 1, %s10
    %p200 = scmp.lt.s32.totalorder %s10, 3
    %p201 = pnand %p199, %p200
    %p202 = pneg %p201
    // Predicated region
    $region33: #{fm_forward.5} parent=5 // pred_check
      _
    $region34: #{fm_forward.5} parent=5 // pred_check_branch
      %204 = sbr.rel (%p201) target = $region36
    $region35: #{fm_forward.5} parent=5 // pred_region
      %s205 = ssub.s32 %s10, 1
      %s206 = smul.u32 2, %s20
      %p207 = scmp.lt.s32.totalorder %s19, 1
      %s208 = scalar_select %p207, %s19, 1
      %p209 = scmp.lt.s32.totalorder %s206, 1
      %s210 = scalar_select %p209, %s206, 1
      %s211 = smul.addr %s208, 2
      %s212 = sadd.s32 %s210, %s211
      %s213 = smul.addr %s212, 4
      %s214 = scalar_lea.vmem %s0, %s213
      %p215 = pneg %p50
      %p216 = pneg %p47
      %s217 = smul.u32 2, %s20
      %p218 = scmp.lt.s32.totalorder %s19, 1
      %s219 = scalar_select %p218, %s19, 1
      %p220 = scmp.lt.s32.totalorder %s217, 1
      %s221 = scalar_select %p220, %s217, 1
      %s222 = smul.addr %s219, 2
      %s223 = sadd.s32 %s221, %s222
      %s224 = smul.addr %s223, 4
      %s225 = scalar_lea.vmem %s1, %s224
      %p226 = pneg %p78
      %p227 = pneg %p75
      %p228 = pneg %p99
      %p229 = pneg %p96
      %p230 = pneg %p120
      %p231 = pneg %p117
      %p232 = pneg %p148
      %p233 = pneg %p145
      %s234 = smul.u32 2, %s20
      %p235 = scmp.lt.s32.totalorder %s19, 1
      %s236 = scalar_select %p235, %s19, 1
      %p237 = scmp.lt.s32.totalorder %s234, 1
      %s238 = scalar_select %p237, %s234, 1
      %s239 = smul.addr %s236, 2
      %s240 = sadd.s32 %s238, %s239
      %s241 = smul.addr %s240, 4
      %s242 = scalar_lea.vmem %s4, %s241
      %s243 = smul.u32 2, %s20
      %p244 = scmp.lt.s32.totalorder %s19, 1
      %s245 = scalar_select %p244, %s19, 1
      %p246 = scmp.lt.s32.totalorder %s243, 1
      %s247 = scalar_select %p246, %s243, 1
      %s248 = smul.addr %s245, 2
      %s249 = sadd.s32 %s247, %s248
      %s250 = smul.addr %s249, 4
      %s251 = scalar_lea.vmem %s0, %s250
      %s252 = smul.u32 2, %s20
      %s253 = smul.u32 2, %s20
      %p254 = scmp.lt.s32.totalorder %s19, 1
      %s255 = scalar_select %p254, %s19, 1
      %p256 = scmp.lt.s32.totalorder %s253, 1
      %s257 = scalar_select %p256, %s253, 1
      %s258 = smul.addr %s255, 2
      %s259 = sadd.s32 %s257, %s258
      %s260 = smul.addr %s259, 4
      %s261 = scalar_lea.vmem %s1, %s260
      %s262 = smul.u32 2, %s20
      %s263 = smul.u32 2, %s20
      %p264 = scmp.lt.s32.totalorder %s19, 1
      %s265 = scalar_select %p264, %s19, 1
      %p266 = scmp.lt.s32.totalorder %s263, 1
      %s267 = scalar_select %p266, %s263, 1
      %s268 = smul.addr %s265, 2
      %s269 = sadd.s32 %s267, %s268
      %s270 = smul.addr %s269, 4
      %s271 = scalar_lea.vmem %s4, %s270
      %s272 = smul.u32 2, %s20
      %v273 = vld [vmem:[%s2] sm:$0xf]
      %v274 = vld [vmem:[%s3] sm:$0xf]
      %v275 = vld [vmem:[%s251] sm:$0xff]
      %277 = vset.pattern.permute.xlu0 0
      %278 = vperm.xlu0 %277, %v273
      %v279 = vpop.permute.xlu0 %278
      %v282 = vlaneseq
      %v283 = vshrl.u32 %v282, 7
      %v284 = vsub.s32 0, %v283
      %v285 = vrot.slane %v275, %v284
      %v286 = vlaneseq
      %v287 = vshrl.u32 %v286, 7
      %v288 = vsub.s32 4, %v287
      %v289 = vrot.slane %v275, %v288
      %v292 = vlaneseq
      %v293 = vshrl.u32 %v292, 7
      %v294 = vsub.s32 0, %v293
      %v295 = vrot.slane %v285, %v294
      %v296 = vlaneseq
      %v297 = vshrl.u32 %v296, 7
      %v298 = vsub.s32 0, %v297
      %v299 = vrot.slane %v289, %v298
      %v300 = vmul.f32 %v279, %v295
      %v301 = vmul.f32 %v279, %v299
      %302 = vset.pattern.permute.xlu0 1
      %303 = vperm.xlu0 %302, %v273
      %v304 = vpop.permute.xlu0 %303
      %v306 = vlaneseq
      %v307 = vshrl.u32 %v306, 7
      %v308 = vsub.s32 1, %v307
      %v309 = vrot.slane %v275, %v308
      %v310 = vlaneseq
      %v311 = vshrl.u32 %v310, 7
      %v312 = vsub.s32 5, %v311
      %v313 = vrot.slane %v275, %v312
      %v316 = vlaneseq
      %v317 = vshrl.u32 %v316, 7
      %v318 = vsub.s32 1, %v317
      %v319 = vrot.slane %v309, %v318
      %v320 = vlaneseq
      %v321 = vshrl.u32 %v320, 7
      %v322 = vsub.s32 1, %v321
      %v323 = vrot.slane %v313, %v322
      %v324 = vmul.f32 %v304, %v319
      %v325 = vmul.f32 %v304, %v323
      %v326 = vadd.f32 %v300, %v324
      %v327 = vadd.f32 %v301, %v325
      %328 = vset.pattern.permute.xlu0 2
      %329 = vperm.xlu0 %328, %v273
      %v330 = vpop.permute.xlu0 %329
      %v332 = vlaneseq
      %v333 = vshrl.u32 %v332, 7
      %v334 = vsub.s32 2, %v333
      %v335 = vrot.slane %v275, %v334
      %v336 = vlaneseq
      %v337 = vshrl.u32 %v336, 7
      %v338 = vsub.s32 6, %v337
      %v339 = vrot.slane %v275, %v338
      %v342 = vlaneseq
      %v343 = vshrl.u32 %v342, 7
      %v344 = vsub.s32 2, %v343
      %v345 = vrot.slane %v335, %v344
      %v346 = vlaneseq
      %v347 = vshrl.u32 %v346, 7
      %v348 = vsub.s32 2, %v347
      %v349 = vrot.slane %v339, %v348
      %v350 = vmul.f32 %v330, %v345
      %v351 = vmul.f32 %v330, %v349
      %v352 = vadd.f32 %v326, %v350
      %v353 = vadd.f32 %v327, %v351
      %354 = vset.pattern.permute.xlu0 3
      %355 = vperm.xlu0 %354, %v273
      %v356 = vpop.permute.xlu0 %355
      %v358 = vlaneseq
      %v359 = vshrl.u32 %v358, 7
      %v360 = vsub.s32 3, %v359
      %v361 = vrot.slane %v275, %v360
      %v362 = vlaneseq
      %v363 = vshrl.u32 %v362, 7
      %v364 = vsub.s32 7, %v363
      %v365 = vrot.slane %v275, %v364
      %v368 = vlaneseq
      %v369 = vshrl.u32 %v368, 7
      %v370 = vsub.s32 3, %v369
      %v371 = vrot.slane %v361, %v370
      %v372 = vlaneseq
      %v373 = vshrl.u32 %v372, 7
      %v374 = vsub.s32 3, %v373
      %v375 = vrot.slane %v365, %v374
      %v376 = vmul.f32 %v356, %v371
      %v377 = vmul.f32 %v356, %v375
      %v378 = vadd.f32 %v352, %v376
      %v379 = vadd.f32 %v353, %v377
      %381 = vset.pattern.permute.xlu0 0
      %382 = vperm.xlu0 %381, %v274
      %v383 = vpop.permute.xlu0 %382
      %v385 = vadd.f32 %v378, %v383
      %v386 = vadd.f32 %v379, %v383
      %v387 = vld [vmem:[%s261] sm:$0xff]
      %v389 = vcombine.high %v387, %v387
      %v391 = vadd.f32 %v385, %v387
      %v392 = vadd.f32 %v386, %v389
      %v395 = vcombine.low %v391, %v392
      %397 = vst [vmem:[%s271] sm:$0xff] %v395
      %s398 = smul.u32 2, %s20
      %p399 = scmp.lt.s32.totalorder %s19, 1
      %s400 = scalar_select %p399, %s19, 1
      %p401 = scmp.lt.s32.totalorder %s398, 1
      %s402 = scalar_select %p401, %s398, 1
      %s403 = smul.addr %s400, 2
      %s404 = sadd.s32 %s402, %s403
      %s405 = smul.addr %s404, 4
      %s406 = scalar_lea.vmem %s4, %s405
      // Predicated region
      $region37: #{fm_forward.5} parent=35 // pred_check
        %p407 = pneg %p145
      $region38: #{fm_forward.5} parent=35 // pred_check_branch
        %409 = sbr.rel (%p407) target = $region40
      $region39: #{fm_forward.5} parent=35 // pred_region
        %s410 = smul.u32 2, %s20
      $region40: #{fm_forward.5} parent=35 // pred_fallthru
        _
    $region36: #{fm_forward.5} parent=5 // pred_fallthru
      _
    %p411 = scmp.le.s32.totalorder 2, %s10
    // Predicated region
    $region41: #{fm_forward.5} parent=5 // pred_check
      %p412 = pneg %p411
    $region42: #{fm_forward.5} parent=5 // pred_check_branch
      %414 = sbr.rel (%p412) target = $region44
    $region43: #{fm_forward.5} parent=5 // pred_region
      %s415 = ssub.s32 %s10, 2
      // Predicated region
      $region45: #{fm_forward.5} parent=43 // pred_check
        %p416 = pneg %p151
      $region46: #{fm_forward.5} parent=43 // pred_check_branch
        %418 = sbr.rel (%p416) target = $region48
      $region47: #{fm_forward.5} parent=43 // pred_region
        %s419 = smul.u32 2, %s22
        %p420 = scmp.lt.s32.totalorder %s21, 1
        %s421 = scalar_select %p420, %s21, 1
        %p422 = scmp.lt.s32.totalorder %s419, 1
        %s423 = scalar_select %p422, %s419, 1
        %s424 = smul.addr %s421, 2
        %s425 = sadd.s32 %s423, %s424
        %s426 = smul.addr %s425, 4
        %s427 = scalar_lea.vmem %s4, %s426
      $region48: #{fm_forward.5} parent=43 // pred_fallthru
        _
    $region44: #{fm_forward.5} parent=5 // pred_fallthru
      _
  $region6: #{fm_forward.5} parent=0 // loop_footer
    %s14 = sadd.s32 1, %s10
  $region7: #{fm_forward.5} parent=0 // loop_footer_branch
    %9 = sbr.rel target = $region3
  $region8: #{fm_forward.5} parent=0 // loop_exit
    _

</llo_original>
